<compile_context>
chip_gen: v5e
topology: v5e:2x2
jax: 0.10.0
libtpu: 0.0.40
codegen_flags: <defaults>
</compile_context>

<pallas_src>
import jax
import jax.numpy as jnp
from jax.experimental import pallas as pl
from jax.experimental.pallas import tpu as pltpu


def _round_up(x, m):
    return ((x + m - 1) // m) * m


def _pick_rows_per_step(Hp, Wp, P, H, B, max_rows):
    """Pick n_ph = patch rows handled per grid step (None if no legal choice).

    Constraints (the (8, 128) BlockSpec rule):
      * n_ph divides Hp,
      * output block second-minor dim n_ph*Wp is a multiple of 8 (or == N),
      * input block second-minor dim n_ph*P is a multiple of 8 (or == H).
    Prefer the largest tile with n_ph*Wp <= max_rows (amortize step overhead,
    keep the MXU fed) while keeping >= 2 total grid steps (v7x megacore).
    """
    valid = []
    for d in range(1, Hp + 1):
        if Hp % d:
            continue
        ok_out = (d * Wp) % 8 == 0 or d == Hp
        ok_in = (d * P) % 8 == 0 or d * P == H
        if ok_out and ok_in:
            valid.append(d)
    if not valid:
        return None
    fit = [d for d in valid if d * Wp <= max_rows] or [min(valid)]
    d = max(fit)
    while B * (Hp // d) < 2:          # keep both v7x TensorCores busy
        smaller = [v for v in fit if v < d]
        if not smaller:
            break
        d = max(smaller)
    return d


def _make_direct_kernel(C, P, Wp, n_ph, compute_dtype):
    """Kernel that reads the NCHW strip directly and rearranges it in VMEM."""

    def kernel(x_ref, w_ref, b_ref, o_ref):
        # x_ref: (1, C, n_ph*P, W) f32 NCHW strip
        # w_ref: (K, Dp) compute_dtype (K order = (j, c, i), host-permuted)
        # b_ref: (1, Dp) f32 ; o_ref: (1, n_ph*Wp, Dp) out_dtype
        rows = []
        for ph in range(n_ph):
            # One row of patches straight from NCHW: (C, P, Wp*P).
            s = x_ref[0, :, ph * P:(ph + 1) * P, 0:Wp * P]
            # rows (c, i) x lanes (wp, j)  ->  rows (wp, j) x lanes (c, i):
            # a single 2-D XLU transpose, which hides under the MXU.
            t = s.reshape(C * P, Wp * P).T
            # Split the (wp, j) rows and re-concatenate the j pieces along
            # lanes -> row = one patch, lanes = K in (j, c, i) order.
            t3 = t.reshape(Wp, P, C * P)
            rows.append(
                jnp.concatenate([t3[:, j, :] for j in range(P)], axis=1))
        lhs = rows[0] if n_ph == 1 else jnp.concatenate(rows, axis=0)
        lhs = lhs.astype(compute_dtype)
        acc = jnp.dot(lhs, w_ref[...], preferred_element_type=jnp.float32)
        o_ref[0] = (acc + b_ref[...]).astype(o_ref.dtype)

    return kernel


def _matmul_bias_kernel(p_ref, w_ref, b_ref, o_ref):
    # Fallback path: pre-extracted patches (TM, K) @ (K, Dp) + bias.
    acc = jnp.dot(p_ref[...], w_ref[...], preferred_element_type=jnp.float32)
    o_ref[...] = (acc + b_ref[...]).astype(o_ref.dtype)


def patch_embeddings(x, weight, bias, patch_size, *,
                     out_dtype=jnp.bfloat16, compute_dtype=jnp.bfloat16,
                     max_rows_per_step=512, fallback_tile_m=512):
    """x: (B, C, H, W) NCHW.  weight: (dim, C, P, P).  bias: (dim,).
    Returns (B, num_patches, dim) == PatchEmbeddings.forward(x).

    compute_dtype=jnp.float32 is the exact-parity mode vs PyTorch's f32
    Conv2d; the default bf16 keeps f32 accumulation.  out_dtype defaults to
    bf16 (downstream ViT blocks run bf16; halves the output HBM stream).
    """
    B, C, H, W = x.shape
    P = int(patch_size)
    dim = weight.shape[0]
    Hp, Wp = H // P, W // P            # floor == Conv2d stride-P truncation
    N = Hp * Wp
    K = C * P * P

    # Lane-dense padded feature dim (no-op for real ViT dims 768/1024/...).
    Dp = _round_up(dim, 128)

    # Weight K axis permuted once on the host to the kernel's (j, c, i) patch
    # ordering; bias kept in f32 for the f32 bias add.
    w_mat = jnp.transpose(weight, (3, 1, 2, 0)).reshape(K, dim).astype(compute_dtype)
    b_mat = bias.reshape(1, dim).astype(jnp.float32)
    if Dp != dim:
        w_mat = jnp.pad(w_mat, ((0, 0), (0, Dp - dim)))
        b_mat = jnp.pad(b_mat, ((0, 0), (0, Dp - dim)))

    out_bytes = jnp.dtype(out_dtype).itemsize
    cmp_bytes = jnp.dtype(compute_dtype).itemsize
    cost = pl.CostEstimate(
        flops=2 * B * N * K * Dp,
        transcendentals=0,
        bytes_accessed=(x.size * x.dtype.itemsize
                        + K * Dp * cmp_bytes + Dp * 4
                        + B * N * Dp * out_bytes),
    )

    out = None
    n_ph = _pick_rows_per_step(Hp, Wp, P, H, B, max_rows_per_step)

    if n_ph is not None:
        m_step = n_ph * Wp
        grid = (B, Hp // n_ph)
        # Scoped VMEM: blocks are modest, but v5e's default limit is 16 MiB.
        est = (2 * C * n_ph * P * W * x.dtype.itemsize   # x strip, double buf
               + K * Dp * cmp_bytes                      # resident weight
               + 2 * m_step * Dp * out_bytes             # out block, double buf
               + 4 * m_step * K * 4)                     # in-kernel staging
        vmem_limit = int(min(max(32 * 2 ** 20, 2 * est), 48 * 2 ** 20))
        kernel = _make_direct_kernel(C, P, Wp, n_ph, compute_dtype)

        def run_direct(single_buffer_weights):
            if single_buffer_weights:
                # Constant index_map => a second pipeline buffer is pure VMEM
                # waste (saves headroom for big dims on v7x's 64 MiB VMEM).
                w_spec = pl.BlockSpec((K, Dp), lambda b, h: (0, 0),
                                      pipeline_mode=pl.Buffered(1))
                b_spec = pl.BlockSpec((1, Dp), lambda b, h: (0, 0),
                                      pipeline_mode=pl.Buffered(1))
            else:
                w_spec = pl.BlockSpec((K, Dp), lambda b, h: (0, 0))
                b_spec = pl.BlockSpec((1, Dp), lambda b, h: (0, 0))
            return pl.pallas_call(
                kernel,
                out_shape=jax.ShapeDtypeStruct((B, N, Dp), out_dtype),
                grid=grid,
                in_specs=[
                    # Direct NCHW read: rectangular strided DMA, no host copy.
                    pl.BlockSpec((1, C, n_ph * P, W), lambda b, h: (b, 0, h, 0)),
                    w_spec,
                    b_spec,
                ],
                out_specs=pl.BlockSpec((1, m_step, Dp), lambda b, h: (b, h, 0)),
                compiler_params=pltpu.CompilerParams(
                    dimension_semantics=("parallel", "parallel"),
                    vmem_limit_bytes=vmem_limit),
                cost_estimate=cost,
            )(x, w_mat, b_mat)

        for single_buffer_weights in (True, False):
            try:
                out = run_direct(single_buffer_weights)
                jax.block_until_ready(out)
                break
            except Exception:
                out = None

    if out is None:
        # TODO(synk): robustness fallback only -- materializes the (M, K) patch
        # matrix on the host (one extra HBM pass) when the in-kernel
        # rearrangement is not lowerable for this patch size / toolchain.
        M = B * N
        patches = (x[:, :, :Hp * P, :Wp * P]
                   .reshape(B, C, Hp, P, Wp, P)
                   .transpose(0, 2, 4, 5, 1, 3)        # (B, Hp, Wp, j, c, i)
                   .reshape(M, K)
                   .astype(compute_dtype))
        tm = min(fallback_tile_m, _round_up(M, 16))
        vmem_limit = int(min(max(32 * 2 ** 20,
                                 4 * (tm * K * cmp_bytes + K * Dp * cmp_bytes
                                      + tm * Dp * out_bytes)),
                             48 * 2 ** 20))
        out = pl.pallas_call(
            _matmul_bias_kernel,
            out_shape=jax.ShapeDtypeStruct((M, Dp), out_dtype),
            grid=(pl.cdiv(M, tm),),
            in_specs=[
                pl.BlockSpec((tm, K), lambda i: (i, 0)),
                pl.BlockSpec((K, Dp), lambda i: (0, 0)),
                pl.BlockSpec((1, Dp), lambda i: (0, 0)),
            ],
            out_specs=pl.BlockSpec((tm, Dp), lambda i: (i, 0)),
            compiler_params=pltpu.CompilerParams(
                dimension_semantics=("parallel",),
                vmem_limit_bytes=vmem_limit),
            cost_estimate=cost,
        )(patches, w_mat, b_mat).reshape(B, N, Dp)

    if Dp != dim:
        # No-op for standard ViT dims.  For odd dims, prefer keeping the padded
        # feature axis through the consumer instead of this extra HBM pass.
        out = out[:, :, :dim]
    return out


if __name__ == "__main__":
    # Small ViT-style config: 32x32 image, patch 8, 4 channels, dim 32
    # -> 16 patches, K = C*P*P = 256.
    B, C, H, W = 2, 4, 32, 32
    P = 8
    DIM = 32

    key = jax.random.PRNGKey(0)
    kx, kw, kb = jax.random.split(key, 3)
    x = jax.random.normal(kx, (B, C, H, W), dtype=jnp.float32)
    # Deterministic synthetic Conv2d(C, DIM, P, P) parameters.
    weight = jax.random.normal(kw, (DIM, C, P, P), dtype=jnp.float32) * 0.02
    bias = jax.random.normal(kb, (DIM,), dtype=jnp.float32) * 0.02

    out = jax.block_until_ready(patch_embeddings(x, weight, bias, P))

    # Pure-JAX f32 reference (Conv2d with kernel==stride == patch matmul).
    Hp, Wp = H // P, W // P
    N, K = Hp * Wp, C * P * P
    ref = (x.reshape(B, C, Hp, P, Wp, P)
             .transpose(0, 2, 4, 1, 3, 5)
             .reshape(B, N, K) @ weight.reshape(DIM, K).T) + bias

    assert out.shape == (B, N, DIM), out.shape
    # bf16 MXU inputs + bf16 output (f32 accumulation / f32 bias) vs the f32
    # reference -> loosened tolerance.
    err = jnp.max(jnp.abs(out.astype(jnp.float32) - ref))
    assert jnp.allclose(out.astype(jnp.float32), ref, atol=2e-2, rtol=2e-2), float(err)

    print("KERNEL_OK")
</pallas_src>

<mosaic_0001>
module attributes {stable_mosaic.version = 11 : i64} {
  func.func @kernel(%arg0: i32, %arg1: i32, %arg2: memref<1x4x32x32xf32, #tpu.memory_space<vmem>>, %arg3: memref<256x128xbf16, #tpu.memory_space<vmem>>, %arg4: memref<1x128xf32, #tpu.memory_space<vmem>>, %arg5: memref<1x16x128xbf16, #tpu.memory_space<vmem>>) attributes {dimension_semantics = [#tpu.dimension_semantics<parallel>, #tpu.dimension_semantics<parallel>], iteration_bounds = array<i64: 2, 1>, scalar_prefetch = 0 : i64, scratch_operands = 0 : i64, tpu.core_type = #tpu.core_type<tc>, window_params = [{transform_indices = @transform_0, window_bounds = array<i64: 1, 4, 32, 32>}, {pipeline_mode = #tpu.pipeline_mode<synchronous>, transform_indices = @transform_1, window_bounds = array<i64: 256, 128>}, {pipeline_mode = #tpu.pipeline_mode<synchronous>, transform_indices = @transform_2, window_bounds = array<i64: 1, 128>}, {transform_indices = @transform_3, window_bounds = array<i64: 1, 16, 128>}]} {
    %c0 = arith.constant 0 : index
    %c0_0 = arith.constant 0 : index
    %c0_1 = arith.constant 0 : index
    %c0_2 = arith.constant 0 : index
    %0 = vector.load %arg2[%c0, %c0_0, %c0_1, %c0_2] : memref<1x4x32x32xf32, #tpu.memory_space<vmem>>, vector<1x4x8x32xf32>
    %1 = vector.shape_cast %0 : vector<1x4x8x32xf32> to vector<4x8x32xf32>
    %2 = vector.shape_cast %1 : vector<4x8x32xf32> to vector<32x32xf32>
    %3 = tpu.transpose %2, [1, 0] : vector<32x32xf32> -> vector<32x32xf32>
    %4 = vector.shape_cast %3 : vector<32x32xf32> to vector<4x8x32xf32>
    %5 = vector.extract_strided_slice %4 {offsets = [0, 0, 0], sizes = [4, 1, 32], strides = [1, 1, 1]} : vector<4x8x32xf32> to vector<4x1x32xf32>
    %6 = vector.shape_cast %5 : vector<4x1x32xf32> to vector<4x32xf32>
    %7 = vector.extract_strided_slice %4 {offsets = [0, 1, 0], sizes = [4, 1, 32], strides = [1, 1, 1]} : vector<4x8x32xf32> to vector<4x1x32xf32>
    %8 = vector.shape_cast %7 : vector<4x1x32xf32> to vector<4x32xf32>
    %9 = vector.extract_strided_slice %4 {offsets = [0, 2, 0], sizes = [4, 1, 32], strides = [1, 1, 1]} : vector<4x8x32xf32> to vector<4x1x32xf32>
    %10 = vector.shape_cast %9 : vector<4x1x32xf32> to vector<4x32xf32>
    %11 = vector.extract_strided_slice %4 {offsets = [0, 3, 0], sizes = [4, 1, 32], strides = [1, 1, 1]} : vector<4x8x32xf32> to vector<4x1x32xf32>
    %12 = vector.shape_cast %11 : vector<4x1x32xf32> to vector<4x32xf32>
    %13 = vector.extract_strided_slice %4 {offsets = [0, 4, 0], sizes = [4, 1, 32], strides = [1, 1, 1]} : vector<4x8x32xf32> to vector<4x1x32xf32>
    %14 = vector.shape_cast %13 : vector<4x1x32xf32> to vector<4x32xf32>
    %15 = vector.extract_strided_slice %4 {offsets = [0, 5, 0], sizes = [4, 1, 32], strides = [1, 1, 1]} : vector<4x8x32xf32> to vector<4x1x32xf32>
    %16 = vector.shape_cast %15 : vector<4x1x32xf32> to vector<4x32xf32>
    %17 = vector.extract_strided_slice %4 {offsets = [0, 6, 0], sizes = [4, 1, 32], strides = [1, 1, 1]} : vector<4x8x32xf32> to vector<4x1x32xf32>
    %18 = vector.shape_cast %17 : vector<4x1x32xf32> to vector<4x32xf32>
    %19 = vector.extract_strided_slice %4 {offsets = [0, 7, 0], sizes = [4, 1, 32], strides = [1, 1, 1]} : vector<4x8x32xf32> to vector<4x1x32xf32>
    %20 = vector.shape_cast %19 : vector<4x1x32xf32> to vector<4x32xf32>
    %21 = tpu.concatenate %6, %8, %10, %12, %14, %16, %18, %20 in 1 : vector<4x32xf32>, vector<4x32xf32>, vector<4x32xf32>, vector<4x32xf32>, vector<4x32xf32>, vector<4x32xf32>, vector<4x32xf32>, vector<4x32xf32> -> vector<4x256xf32>
    %c0_3 = arith.constant 0 : index
    %c0_4 = arith.constant 0 : index
    %c8 = arith.constant 8 : index
    %c0_5 = arith.constant 0 : index
    %22 = vector.load %arg2[%c0_3, %c0_4, %c8, %c0_5] : memref<1x4x32x32xf32, #tpu.memory_space<vmem>>, vector<1x4x8x32xf32>
    %23 = vector.shape_cast %22 : vector<1x4x8x32xf32> to vector<4x8x32xf32>
    %24 = vector.shape_cast %23 : vector<4x8x32xf32> to vector<32x32xf32>
    %25 = tpu.transpose %24, [1, 0] : vector<32x32xf32> -> vector<32x32xf32>
    %26 = vector.shape_cast %25 : vector<32x32xf32> to vector<4x8x32xf32>
    %27 = vector.extract_strided_slice %26 {offsets = [0, 0, 0], sizes = [4, 1, 32], strides = [1, 1, 1]} : vector<4x8x32xf32> to vector<4x1x32xf32>
    %28 = vector.shape_cast %27 : vector<4x1x32xf32> to vector<4x32xf32>
    %29 = vector.extract_strided_slice %26 {offsets = [0, 1, 0], sizes = [4, 1, 32], strides = [1, 1, 1]} : vector<4x8x32xf32> to vector<4x1x32xf32>
    %30 = vector.shape_cast %29 : vector<4x1x32xf32> to vector<4x32xf32>
    %31 = vector.extract_strided_slice %26 {offsets = [0, 2, 0], sizes = [4, 1, 32], strides = [1, 1, 1]} : vector<4x8x32xf32> to vector<4x1x32xf32>
    %32 = vector.shape_cast %31 : vector<4x1x32xf32> to vector<4x32xf32>
    %33 = vector.extract_strided_slice %26 {offsets = [0, 3, 0], sizes = [4, 1, 32], strides = [1, 1, 1]} : vector<4x8x32xf32> to vector<4x1x32xf32>
    %34 = vector.shape_cast %33 : vector<4x1x32xf32> to vector<4x32xf32>
    %35 = vector.extract_strided_slice %26 {offsets = [0, 4, 0], sizes = [4, 1, 32], strides = [1, 1, 1]} : vector<4x8x32xf32> to vector<4x1x32xf32>
    %36 = vector.shape_cast %35 : vector<4x1x32xf32> to vector<4x32xf32>
    %37 = vector.extract_strided_slice %26 {offsets = [0, 5, 0], sizes = [4, 1, 32], strides = [1, 1, 1]} : vector<4x8x32xf32> to vector<4x1x32xf32>
    %38 = vector.shape_cast %37 : vector<4x1x32xf32> to vector<4x32xf32>
    %39 = vector.extract_strided_slice %26 {offsets = [0, 6, 0], sizes = [4, 1, 32], strides = [1, 1, 1]} : vector<4x8x32xf32> to vector<4x1x32xf32>
    %40 = vector.shape_cast %39 : vector<4x1x32xf32> to vector<4x32xf32>
    %41 = vector.extract_strided_slice %26 {offsets = [0, 7, 0], sizes = [4, 1, 32], strides = [1, 1, 1]} : vector<4x8x32xf32> to vector<4x1x32xf32>
    %42 = vector.shape_cast %41 : vector<4x1x32xf32> to vector<4x32xf32>
    %43 = tpu.concatenate %28, %30, %32, %34, %36, %38, %40, %42 in 1 : vector<4x32xf32>, vector<4x32xf32>, vector<4x32xf32>, vector<4x32xf32>, vector<4x32xf32>, vector<4x32xf32>, vector<4x32xf32>, vector<4x32xf32> -> vector<4x256xf32>
    %c0_6 = arith.constant 0 : index
    %c0_7 = arith.constant 0 : index
    %c16 = arith.constant 16 : index
    %c0_8 = arith.constant 0 : index
    %44 = vector.load %arg2[%c0_6, %c0_7, %c16, %c0_8] : memref<1x4x32x32xf32, #tpu.memory_space<vmem>>, vector<1x4x8x32xf32>
    %45 = vector.shape_cast %44 : vector<1x4x8x32xf32> to vector<4x8x32xf32>
    %46 = vector.shape_cast %45 : vector<4x8x32xf32> to vector<32x32xf32>
    %47 = tpu.transpose %46, [1, 0] : vector<32x32xf32> -> vector<32x32xf32>
    %48 = vector.shape_cast %47 : vector<32x32xf32> to vector<4x8x32xf32>
    %49 = vector.extract_strided_slice %48 {offsets = [0, 0, 0], sizes = [4, 1, 32], strides = [1, 1, 1]} : vector<4x8x32xf32> to vector<4x1x32xf32>
    %50 = vector.shape_cast %49 : vector<4x1x32xf32> to vector<4x32xf32>
    %51 = vector.extract_strided_slice %48 {offsets = [0, 1, 0], sizes = [4, 1, 32], strides = [1, 1, 1]} : vector<4x8x32xf32> to vector<4x1x32xf32>
    %52 = vector.shape_cast %51 : vector<4x1x32xf32> to vector<4x32xf32>
    %53 = vector.extract_strided_slice %48 {offsets = [0, 2, 0], sizes = [4, 1, 32], strides = [1, 1, 1]} : vector<4x8x32xf32> to vector<4x1x32xf32>
    %54 = vector.shape_cast %53 : vector<4x1x32xf32> to vector<4x32xf32>
    %55 = vector.extract_strided_slice %48 {offsets = [0, 3, 0], sizes = [4, 1, 32], strides = [1, 1, 1]} : vector<4x8x32xf32> to vector<4x1x32xf32>
    %56 = vector.shape_cast %55 : vector<4x1x32xf32> to vector<4x32xf32>
    %57 = vector.extract_strided_slice %48 {offsets = [0, 4, 0], sizes = [4, 1, 32], strides = [1, 1, 1]} : vector<4x8x32xf32> to vector<4x1x32xf32>
    %58 = vector.shape_cast %57 : vector<4x1x32xf32> to vector<4x32xf32>
    %59 = vector.extract_strided_slice %48 {offsets = [0, 5, 0], sizes = [4, 1, 32], strides = [1, 1, 1]} : vector<4x8x32xf32> to vector<4x1x32xf32>
    %60 = vector.shape_cast %59 : vector<4x1x32xf32> to vector<4x32xf32>
    %61 = vector.extract_strided_slice %48 {offsets = [0, 6, 0], sizes = [4, 1, 32], strides = [1, 1, 1]} : vector<4x8x32xf32> to vector<4x1x32xf32>
    %62 = vector.shape_cast %61 : vector<4x1x32xf32> to vector<4x32xf32>
    %63 = vector.extract_strided_slice %48 {offsets = [0, 7, 0], sizes = [4, 1, 32], strides = [1, 1, 1]} : vector<4x8x32xf32> to vector<4x1x32xf32>
    %64 = vector.shape_cast %63 : vector<4x1x32xf32> to vector<4x32xf32>
    %65 = tpu.concatenate %50, %52, %54, %56, %58, %60, %62, %64 in 1 : vector<4x32xf32>, vector<4x32xf32>, vector<4x32xf32>, vector<4x32xf32>, vector<4x32xf32>, vector<4x32xf32>, vector<4x32xf32>, vector<4x32xf32> -> vector<4x256xf32>
    %c0_9 = arith.constant 0 : index
    %c0_10 = arith.constant 0 : index
    %c24 = arith.constant 24 : index
    %c0_11 = arith.constant 0 : index
    %66 = vector.load %arg2[%c0_9, %c0_10, %c24, %c0_11] : memref<1x4x32x32xf32, #tpu.memory_space<vmem>>, vector<1x4x8x32xf32>
    %67 = vector.shape_cast %66 : vector<1x4x8x32xf32> to vector<4x8x32xf32>
    %68 = vector.shape_cast %67 : vector<4x8x32xf32> to vector<32x32xf32>
    %69 = tpu.transpose %68, [1, 0] : vector<32x32xf32> -> vector<32x32xf32>
    %70 = vector.shape_cast %69 : vector<32x32xf32> to vector<4x8x32xf32>
    %71 = vector.extract_strided_slice %70 {offsets = [0, 0, 0], sizes = [4, 1, 32], strides = [1, 1, 1]} : vector<4x8x32xf32> to vector<4x1x32xf32>
    %72 = vector.shape_cast %71 : vector<4x1x32xf32> to vector<4x32xf32>
    %73 = vector.extract_strided_slice %70 {offsets = [0, 1, 0], sizes = [4, 1, 32], strides = [1, 1, 1]} : vector<4x8x32xf32> to vector<4x1x32xf32>
    %74 = vector.shape_cast %73 : vector<4x1x32xf32> to vector<4x32xf32>
    %75 = vector.extract_strided_slice %70 {offsets = [0, 2, 0], sizes = [4, 1, 32], strides = [1, 1, 1]} : vector<4x8x32xf32> to vector<4x1x32xf32>
    %76 = vector.shape_cast %75 : vector<4x1x32xf32> to vector<4x32xf32>
    %77 = vector.extract_strided_slice %70 {offsets = [0, 3, 0], sizes = [4, 1, 32], strides = [1, 1, 1]} : vector<4x8x32xf32> to vector<4x1x32xf32>
    %78 = vector.shape_cast %77 : vector<4x1x32xf32> to vector<4x32xf32>
    %79 = vector.extract_strided_slice %70 {offsets = [0, 4, 0], sizes = [4, 1, 32], strides = [1, 1, 1]} : vector<4x8x32xf32> to vector<4x1x32xf32>
    %80 = vector.shape_cast %79 : vector<4x1x32xf32> to vector<4x32xf32>
    %81 = vector.extract_strided_slice %70 {offsets = [0, 5, 0], sizes = [4, 1, 32], strides = [1, 1, 1]} : vector<4x8x32xf32> to vector<4x1x32xf32>
    %82 = vector.shape_cast %81 : vector<4x1x32xf32> to vector<4x32xf32>
    %83 = vector.extract_strided_slice %70 {offsets = [0, 6, 0], sizes = [4, 1, 32], strides = [1, 1, 1]} : vector<4x8x32xf32> to vector<4x1x32xf32>
    %84 = vector.shape_cast %83 : vector<4x1x32xf32> to vector<4x32xf32>
    %85 = vector.extract_strided_slice %70 {offsets = [0, 7, 0], sizes = [4, 1, 32], strides = [1, 1, 1]} : vector<4x8x32xf32> to vector<4x1x32xf32>
    %86 = vector.shape_cast %85 : vector<4x1x32xf32> to vector<4x32xf32>
    %87 = tpu.concatenate %72, %74, %76, %78, %80, %82, %84, %86 in 1 : vector<4x32xf32>, vector<4x32xf32>, vector<4x32xf32>, vector<4x32xf32>, vector<4x32xf32>, vector<4x32xf32>, vector<4x32xf32>, vector<4x32xf32> -> vector<4x256xf32>
    %88 = tpu.concatenate %21, %43, %65, %87 in 0 : vector<4x256xf32>, vector<4x256xf32>, vector<4x256xf32>, vector<4x256xf32> -> vector<16x256xf32>
    %89 = arith.truncf %88 : vector<16x256xf32> to vector<16x256xbf16>
    %c0_12 = arith.constant 0 : index
    %c0_13 = arith.constant 0 : index
    %90 = vector.load %arg3[%c0_12, %c0_13] : memref<256x128xbf16, #tpu.memory_space<vmem>>, vector<256x128xbf16>
    %cst = arith.constant dense<0.000000e+00> : vector<16x128xf32>
    %91 = tpu.matmul %89, %90, %cst {dimension_numbers = #tpu.dot_dimension_numbers<[1], [0], [0], [1], [0, 0, 1, 1], [], []>} : vector<16x256xbf16>, vector<256x128xbf16>, vector<16x128xf32> -> vector<16x128xf32>
    %c0_14 = arith.constant 0 : index
    %c0_15 = arith.constant 0 : index
    %92 = vector.load %arg4[%c0_14, %c0_15] : memref<1x128xf32, #tpu.memory_space<vmem>>, vector<1x128xf32>
    %93 = vector.broadcast %92 : vector<1x128xf32> to vector<16x128xf32>
    %94 = arith.addf %91, %93 : vector<16x128xf32>
    %95 = arith.truncf %94 : vector<16x128xf32> to vector<16x128xbf16>
    %c0_16 = arith.constant 0 : index
    %c0_17 = arith.constant 0 : index
    %c0_18 = arith.constant 0 : index
    %96 = vector.load %arg5[%c0_16, %c0_17, %c0_18] : memref<1x16x128xbf16, #tpu.memory_space<vmem>>, vector<1x16x128xbf16>
    %97 = vector.shape_cast %96 : vector<1x16x128xbf16> to vector<16x128xbf16>
    %98 = vector.shape_cast %95 : vector<16x128xbf16> to vector<1x16x128xbf16>
    tpu.vector_store %arg5[%c0_16, %c0_17, %c0_18], %98 {strides = array<i32>} : memref<1x16x128xbf16, #tpu.memory_space<vmem>>, vector<1x16x128xbf16>,
    return
  }
  func.func @transform_0(%arg0: i32, %arg1: i32) -> (i32, i32, i32, i32) {
    %c0_i32 = arith.constant 0 : i32
    %c0_i32_0 = arith.constant 0 : i32
    %c0_i32_1 = arith.constant 0 : i32
    return %arg0, %c0_i32, %arg1, %c0_i32_0 : i32, i32, i32, i32
  }
  func.func @transform_1(%arg0: i32, %arg1: i32) -> (i32, i32) {
    %c0_i32 = arith.constant 0 : i32
    %c0_i32_0 = arith.constant 0 : i32
    %c0_i32_1 = arith.constant 0 : i32
    return %c0_i32, %c0_i32_0 : i32, i32
  }
  func.func @transform_2(%arg0: i32, %arg1: i32) -> (i32, i32) {
    %c0_i32 = arith.constant 0 : i32
    %c0_i32_0 = arith.constant 0 : i32
    %c0_i32_1 = arith.constant 0 : i32
    return %c0_i32, %c0_i32_0 : i32, i32
  }
  func.func @transform_3(%arg0: i32, %arg1: i32) -> (i32, i32, i32) {
    %c0_i32 = arith.constant 0 : i32
    %c0_i32_0 = arith.constant 0 : i32
    return %arg0, %arg1, %c0_i32 : i32, i32, i32
  }
}

module attributes {stable_mosaic.version = 11 : i64} {
  func.func @kernel(%arg0: i32, %arg1: i32, %arg2: memref<1x4x32x32xf32, #tpu.memory_space<vmem>>, %arg3: memref<256x128xbf16, #tpu.memory_space<vmem>>, %arg4: memref<1x128xf32, #tpu.memory_space<vmem>>, %arg5: memref<1x16x128xbf16, #tpu.memory_space<vmem>>) attributes {dimension_semantics = [#tpu.dimension_semantics<parallel>, #tpu.dimension_semantics<parallel>], iteration_bounds = array<i64: 2, 1>, scalar_prefetch = 0 : i64, scratch_operands = 0 : i64, tpu.core_type = #tpu.core_type<tc>, window_params = [{transform_indices = @transform_0, window_bounds = array<i64: 1, 4, 32, 32>}, {pipeline_mode = #tpu.pipeline_mode<synchronous>, transform_indices = @transform_1, window_bounds = array<i64: 256, 128>}, {pipeline_mode = #tpu.pipeline_mode<synchronous>, transform_indices = @transform_2, window_bounds = array<i64: 1, 128>}, {transform_indices = @transform_3, window_bounds = array<i64: 1, 16, 128>}]} {
    %c0 = arith.constant 0 : index
    %c0_0 = arith.constant 0 : index
    %c0_1 = arith.constant 0 : index
    %c0_2 = arith.constant 0 : index
    %0 = vector.load %arg2[%c0, %c0_0, %c0_1, %c0_2] : memref<1x4x32x32xf32, #tpu.memory_space<vmem>>, vector<1x4x8x32xf32>
    %1 = vector.shape_cast %0 : vector<1x4x8x32xf32> to vector<4x8x32xf32>
    %2 = vector.shape_cast %1 : vector<4x8x32xf32> to vector<32x32xf32>
    %3 = tpu.transpose %2, [1, 0] : vector<32x32xf32> -> vector<32x32xf32>
    %4 = vector.shape_cast %3 : vector<32x32xf32> to vector<4x8x32xf32>
    %5 = vector.extract_strided_slice %4 {offsets = [0, 0, 0], sizes = [4, 1, 32], strides = [1, 1, 1]} : vector<4x8x32xf32> to vector<4x1x32xf32>
    %6 = vector.shape_cast %5 : vector<4x1x32xf32> to vector<4x32xf32>
    %7 = vector.extract_strided_slice %4 {offsets = [0, 1, 0], sizes = [4, 1, 32], strides = [1, 1, 1]} : vector<4x8x32xf32> to vector<4x1x32xf32>
    %8 = vector.shape_cast %7 : vector<4x1x32xf32> to vector<4x32xf32>
    %9 = vector.extract_strided_slice %4 {offsets = [0, 2, 0], sizes = [4, 1, 32], strides = [1, 1, 1]} : vector<4x8x32xf32> to vector<4x1x32xf32>
    %10 = vector.shape_cast %9 : vector<4x1x32xf32> to vector<4x32xf32>
    %11 = vector.extract_strided_slice %4 {offsets = [0, 3, 0], sizes = [4, 1, 32], strides = [1, 1, 1]} : vector<4x8x32xf32> to vector<4x1x32xf32>
    %12 = vector.shape_cast %11 : vector<4x1x32xf32> to vector<4x32xf32>
    %13 = vector.extract_strided_slice %4 {offsets = [0, 4, 0], sizes = [4, 1, 32], strides = [1, 1, 1]} : vector<4x8x32xf32> to vector<4x1x32xf32>
    %14 = vector.shape_cast %13 : vector<4x1x32xf32> to vector<4x32xf32>
    %15 = vector.extract_strided_slice %4 {offsets = [0, 5, 0], sizes = [4, 1, 32], strides = [1, 1, 1]} : vector<4x8x32xf32> to vector<4x1x32xf32>
    %16 = vector.shape_cast %15 : vector<4x1x32xf32> to vector<4x32xf32>
    %17 = vector.extract_strided_slice %4 {offsets = [0, 6, 0], sizes = [4, 1, 32], strides = [1, 1, 1]} : vector<4x8x32xf32> to vector<4x1x32xf32>
    %18 = vector.shape_cast %17 : vector<4x1x32xf32> to vector<4x32xf32>
    %19 = vector.extract_strided_slice %4 {offsets = [0, 7, 0], sizes = [4, 1, 32], strides = [1, 1, 1]} : vector<4x8x32xf32> to vector<4x1x32xf32>
    %20 = vector.shape_cast %19 : vector<4x1x32xf32> to vector<4x32xf32>
    %21 = tpu.concatenate %6, %8, %10, %12, %14, %16, %18, %20 in 1 : vector<4x32xf32>, vector<4x32xf32>, vector<4x32xf32>, vector<4x32xf32>, vector<4x32xf32>, vector<4x32xf32>, vector<4x32xf32>, vector<4x32xf32> -> vector<4x256xf32>
    %c0_3 = arith.constant 0 : index
    %c0_4 = arith.constant 0 : index
    %c8 = arith.constant 8 : index
    %c0_5 = arith.constant 0 : index
    %22 = vector.load %arg2[%c0_3, %c0_4, %c8, %c0_5] : memref<1x4x32x32xf32, #tpu.memory_space<vmem>>, vector<1x4x8x32xf32>
    %23 = vector.shape_cast %22 : vector<1x4x8x32xf32> to vector<4x8x32xf32>
    %24 = vector.shape_cast %23 : vector<4x8x32xf32> to vector<32x32xf32>
    %25 = tpu.transpose %24, [1, 0] : vector<32x32xf32> -> vector<32x32xf32>
    %26 = vector.shape_cast %25 : vector<32x32xf32> to vector<4x8x32xf32>
    %27 = vector.extract_strided_slice %26 {offsets = [0, 0, 0], sizes = [4, 1, 32], strides = [1, 1, 1]} : vector<4x8x32xf32> to vector<4x1x32xf32>
    %28 = vector.shape_cast %27 : vector<4x1x32xf32> to vector<4x32xf32>
    %29 = vector.extract_strided_slice %26 {offsets = [0, 1, 0], sizes = [4, 1, 32], strides = [1, 1, 1]} : vector<4x8x32xf32> to vector<4x1x32xf32>
    %30 = vector.shape_cast %29 : vector<4x1x32xf32> to vector<4x32xf32>
    %31 = vector.extract_strided_slice %26 {offsets = [0, 2, 0], sizes = [4, 1, 32], strides = [1, 1, 1]} : vector<4x8x32xf32> to vector<4x1x32xf32>
    %32 = vector.shape_cast %31 : vector<4x1x32xf32> to vector<4x32xf32>
    %33 = vector.extract_strided_slice %26 {offsets = [0, 3, 0], sizes = [4, 1, 32], strides = [1, 1, 1]} : vector<4x8x32xf32> to vector<4x1x32xf32>
    %34 = vector.shape_cast %33 : vector<4x1x32xf32> to vector<4x32xf32>
    %35 = vector.extract_strided_slice %26 {offsets = [0, 4, 0], sizes = [4, 1, 32], strides = [1, 1, 1]} : vector<4x8x32xf32> to vector<4x1x32xf32>
    %36 = vector.shape_cast %35 : vector<4x1x32xf32> to vector<4x32xf32>
    %37 = vector.extract_strided_slice %26 {offsets = [0, 5, 0], sizes = [4, 1, 32], strides = [1, 1, 1]} : vector<4x8x32xf32> to vector<4x1x32xf32>
    %38 = vector.shape_cast %37 : vector<4x1x32xf32> to vector<4x32xf32>
    %39 = vector.extract_strided_slice %26 {offsets = [0, 6, 0], sizes = [4, 1, 32], strides = [1, 1, 1]} : vector<4x8x32xf32> to vector<4x1x32xf32>
    %40 = vector.shape_cast %39 : vector<4x1x32xf32> to vector<4x32xf32>
    %41 = vector.extract_strided_slice %26 {offsets = [0, 7, 0], sizes = [4, 1, 32], strides = [1, 1, 1]} : vector<4x8x32xf32> to vector<4x1x32xf32>
    %42 = vector.shape_cast %41 : vector<4x1x32xf32> to vector<4x32xf32>
    %43 = tpu.concatenate %28, %30, %32, %34, %36, %38, %40, %42 in 1 : vector<4x32xf32>, vector<4x32xf32>, vector<4x32xf32>, vector<4x32xf32>, vector<4x32xf32>, vector<4x32xf32>, vector<4x32xf32>, vector<4x32xf32> -> vector<4x256xf32>
    %c0_6 = arith.constant 0 : index
    %c0_7 = arith.constant 0 : index
    %c16 = arith.constant 16 : index
    %c0_8 = arith.constant 0 : index
    %44 = vector.load %arg2[%c0_6, %c0_7, %c16, %c0_8] : memref<1x4x32x32xf32, #tpu.memory_space<vmem>>, vector<1x4x8x32xf32>
    %45 = vector.shape_cast %44 : vector<1x4x8x32xf32> to vector<4x8x32xf32>
    %46 = vector.shape_cast %45 : vector<4x8x32xf32> to vector<32x32xf32>
    %47 = tpu.transpose %46, [1, 0] : vector<32x32xf32> -> vector<32x32xf32>
    %48 = vector.shape_cast %47 : vector<32x32xf32> to vector<4x8x32xf32>
    %49 = vector.extract_strided_slice %48 {offsets = [0, 0, 0], sizes = [4, 1, 32], strides = [1, 1, 1]} : vector<4x8x32xf32> to vector<4x1x32xf32>
    %50 = vector.shape_cast %49 : vector<4x1x32xf32> to vector<4x32xf32>
    %51 = vector.extract_strided_slice %48 {offsets = [0, 1, 0], sizes = [4, 1, 32], strides = [1, 1, 1]} : vector<4x8x32xf32> to vector<4x1x32xf32>
    %52 = vector.shape_cast %51 : vector<4x1x32xf32> to vector<4x32xf32>
    %53 = vector.extract_strided_slice %48 {offsets = [0, 2, 0], sizes = [4, 1, 32], strides = [1, 1, 1]} : vector<4x8x32xf32> to vector<4x1x32xf32>
    %54 = vector.shape_cast %53 : vector<4x1x32xf32> to vector<4x32xf32>
    %55 = vector.extract_strided_slice %48 {offsets = [0, 3, 0], sizes = [4, 1, 32], strides = [1, 1, 1]} : vector<4x8x32xf32> to vector<4x1x32xf32>
    %56 = vector.shape_cast %55 : vector<4x1x32xf32> to vector<4x32xf32>
    %57 = vector.extract_strided_slice %48 {offsets = [0, 4, 0], sizes = [4, 1, 32], strides = [1, 1, 1]} : vector<4x8x32xf32> to vector<4x1x32xf32>
    %58 = vector.shape_cast %57 : vector<4x1x32xf32> to vector<4x32xf32>
    %59 = vector.extract_strided_slice %48 {offsets = [0, 5, 0], sizes = [4, 1, 32], strides = [1, 1, 1]} : vector<4x8x32xf32> to vector<4x1x32xf32>
    %60 = vector.shape_cast %59 : vector<4x1x32xf32> to vector<4x32xf32>
    %61 = vector.extract_strided_slice %48 {offsets = [0, 6, 0], sizes = [4, 1, 32], strides = [1, 1, 1]} : vector<4x8x32xf32> to vector<4x1x32xf32>
    %62 = vector.shape_cast %61 : vector<4x1x32xf32> to vector<4x32xf32>
    %63 = vector.extract_strided_slice %48 {offsets = [0, 7, 0], sizes = [4, 1, 32], strides = [1, 1, 1]} : vector<4x8x32xf32> to vector<4x1x32xf32>
    %64 = vector.shape_cast %63 : vector<4x1x32xf32> to vector<4x32xf32>
    %65 = tpu.concatenate %50, %52, %54, %56, %58, %60, %62, %64 in 1 : vector<4x32xf32>, vector<4x32xf32>, vector<4x32xf32>, vector<4x32xf32>, vector<4x32xf32>, vector<4x32xf32>, vector<4x32xf32>, vector<4x32xf32> -> vector<4x256xf32>
    %c0_9 = arith.constant 0 : index
    %c0_10 = arith.constant 0 : index
    %c24 = arith.constant 24 : index
    %c0_11 = arith.constant 0 : index
    %66 = vector.load %arg2[%c0_9, %c0_10, %c24, %c0_11] : memref<1x4x32x32xf32, #tpu.memory_space<vmem>>, vector<1x4x8x32xf32>
    %67 = vector.shape_cast %66 : vector<1x4x8x32xf32> to vector<4x8x32xf32>
    %68 = vector.shape_cast %67 : vector<4x8x32xf32> to vector<32x32xf32>
    %69 = tpu.transpose %68, [1, 0] : vector<32x32xf32> -> vector<32x32xf32>
    %70 = vector.shape_cast %69 : vector<32x32xf32> to vector<4x8x32xf32>
    %71 = vector.extract_strided_slice %70 {offsets = [0, 0, 0], sizes = [4, 1, 32], strides = [1, 1, 1]} : vector<4x8x32xf32> to vector<4x1x32xf32>
    %72 = vector.shape_cast %71 : vector<4x1x32xf32> to vector<4x32xf32>
    %73 = vector.extract_strided_slice %70 {offsets = [0, 1, 0], sizes = [4, 1, 32], strides = [1, 1, 1]} : vector<4x8x32xf32> to vector<4x1x32xf32>
    %74 = vector.shape_cast %73 : vector<4x1x32xf32> to vector<4x32xf32>
    %75 = vector.extract_strided_slice %70 {offsets = [0, 2, 0], sizes = [4, 1, 32], strides = [1, 1, 1]} : vector<4x8x32xf32> to vector<4x1x32xf32>
    %76 = vector.shape_cast %75 : vector<4x1x32xf32> to vector<4x32xf32>
    %77 = vector.extract_strided_slice %70 {offsets = [0, 3, 0], sizes = [4, 1, 32], strides = [1, 1, 1]} : vector<4x8x32xf32> to vector<4x1x32xf32>
    %78 = vector.shape_cast %77 : vector<4x1x32xf32> to vector<4x32xf32>
    %79 = vector.extract_strided_slice %70 {offsets = [0, 4, 0], sizes = [4, 1, 32], strides = [1, 1, 1]} : vector<4x8x32xf32> to vector<4x1x32xf32>
    %80 = vector.shape_cast %79 : vector<4x1x32xf32> to vector<4x32xf32>
    %81 = vector.extract_strided_slice %70 {offsets = [0, 5, 0], sizes = [4, 1, 32], strides = [1, 1, 1]} : vector<4x8x32xf32> to vector<4x1x32xf32>
    %82 = vector.shape_cast %81 : vector<4x1x32xf32> to vector<4x32xf32>
    %83 = vector.extract_strided_slice %70 {offsets = [0, 6, 0], sizes = [4, 1, 32], strides = [1, 1, 1]} : vector<4x8x32xf32> to vector<4x1x32xf32>
    %84 = vector.shape_cast %83 : vector<4x1x32xf32> to vector<4x32xf32>
    %85 = vector.extract_strided_slice %70 {offsets = [0, 7, 0], sizes = [4, 1, 32], strides = [1, 1, 1]} : vector<4x8x32xf32> to vector<4x1x32xf32>
    %86 = vector.shape_cast %85 : vector<4x1x32xf32> to vector<4x32xf32>
    %87 = tpu.concatenate %72, %74, %76, %78, %80, %82, %84, %86 in 1 : vector<4x32xf32>, vector<4x32xf32>, vector<4x32xf32>, vector<4x32xf32>, vector<4x32xf32>, vector<4x32xf32>, vector<4x32xf32>, vector<4x32xf32> -> vector<4x256xf32>
    %88 = tpu.concatenate %21, %43, %65, %87 in 0 : vector<4x256xf32>, vector<4x256xf32>, vector<4x256xf32>, vector<4x256xf32> -> vector<16x256xf32>
    %89 = arith.truncf %88 : vector<16x256xf32> to vector<16x256xbf16>
    %c0_12 = arith.constant 0 : index
    %c0_13 = arith.constant 0 : index
    %90 = vector.load %arg3[%c0_12, %c0_13] : memref<256x128xbf16, #tpu.memory_space<vmem>>, vector<256x128xbf16>
    %cst = arith.constant dense<0.000000e+00> : vector<16x128xf32>
    %91 = tpu.matmul %89, %90, %cst {dimension_numbers = #tpu.dot_dimension_numbers<[1], [0], [0], [1], [0, 0, 1, 1], [], []>} : vector<16x256xbf16>, vector<256x128xbf16>, vector<16x128xf32> -> vector<16x128xf32>
    %c0_14 = arith.constant 0 : index
    %c0_15 = arith.constant 0 : index
    %92 = vector.load %arg4[%c0_14, %c0_15] : memref<1x128xf32, #tpu.memory_space<vmem>>, vector<1x128xf32>
    %93 = vector.broadcast %92 : vector<1x128xf32> to vector<16x128xf32>
    %94 = arith.addf %91, %93 : vector<16x128xf32>
    %95 = arith.truncf %94 : vector<16x128xf32> to vector<16x128xbf16>
    %c0_16 = arith.constant 0 : index
    %c0_17 = arith.constant 0 : index
    %c0_18 = arith.constant 0 : index
    %96 = vector.load %arg5[%c0_16, %c0_17, %c0_18] : memref<1x16x128xbf16, #tpu.memory_space<vmem>>, vector<1x16x128xbf16>
    %97 = vector.shape_cast %96 : vector<1x16x128xbf16> to vector<16x128xbf16>
    %98 = vector.shape_cast %95 : vector<16x128xbf16> to vector<1x16x128xbf16>
    tpu.vector_store %arg5[%c0_16, %c0_17, %c0_18], %98 {strides = array<i32>} : memref<1x16x128xbf16, #tpu.memory_space<vmem>>, vector<1x16x128xbf16>,
    return
  }
  func.func @transform_0(%arg0: i32, %arg1: i32) -> (i32, i32, i32, i32) {
    %c0_i32 = arith.constant 0 : i32
    %c0_i32_0 = arith.constant 0 : i32
    %c0_i32_1 = arith.constant 0 : i32
    return %arg0, %c0_i32, %arg1, %c0_i32_0 : i32, i32, i32, i32
  }
  func.func @transform_1(%arg0: i32, %arg1: i32) -> (i32, i32) {
    %c0_i32 = arith.constant 0 : i32
    %c0_i32_0 = arith.constant 0 : i32
    %c0_i32_1 = arith.constant 0 : i32
    return %c0_i32, %c0_i32_0 : i32, i32
  }
  func.func @transform_2(%arg0: i32, %arg1: i32) -> (i32, i32) {
    %c0_i32 = arith.constant 0 : i32
    %c0_i32_0 = arith.constant 0 : i32
    %c0_i32_1 = arith.constant 0 : i32
    return %c0_i32, %c0_i32_0 : i32, i32
  }
  func.func @transform_3(%arg0: i32, %arg1: i32) -> (i32, i32, i32) {
    %c0_i32 = arith.constant 0 : i32
    %c0_i32_0 = arith.constant 0 : i32
    return %arg0, %arg1, %c0_i32 : i32, i32, i32
  }
}

module attributes {stable_mosaic.version = 11 : i64} {
  func.func @_matmul_bias_kernel(%arg0: i32, %arg1: memref<32x256xbf16, #tpu.memory_space<vmem>>, %arg2: memref<256x128xbf16, #tpu.memory_space<vmem>>, %arg3: memref<1x128xf32, #tpu.memory_space<vmem>>, %arg4: memref<32x128xbf16, #tpu.memory_space<vmem>>) attributes {dimension_semantics = [#tpu.dimension_semantics<parallel>], iteration_bounds = array<i64: 1>, scalar_prefetch = 0 : i64, scratch_operands = 0 : i64, tpu.core_type = #tpu.core_type<tc>, window_params = [{transform_indices = @transform_0, window_bounds = array<i64: 32, 256>}, {pipeline_mode = #tpu.pipeline_mode<synchronous>, transform_indices = @transform_1, window_bounds = array<i64: 256, 128>}, {pipeline_mode = #tpu.pipeline_mode<synchronous>, transform_indices = @transform_2, window_bounds = array<i64: 1, 128>}, {transform_indices = @transform_3, window_bounds = array<i64: 32, 128>}]} {
    %c0 = arith.constant 0 : index
    %c0_0 = arith.constant 0 : index
    %0 = vector.load %arg1[%c0, %c0_0] : memref<32x256xbf16, #tpu.memory_space<vmem>>, vector<32x256xbf16>
    %c0_1 = arith.constant 0 : index
    %c0_2 = arith.constant 0 : index
    %1 = vector.load %arg2[%c0_1, %c0_2] : memref<256x128xbf16, #tpu.memory_space<vmem>>, vector<256x128xbf16>
    %cst = arith.constant dense<0.000000e+00> : vector<32x128xf32>
    %2 = tpu.matmul %0, %1, %cst {dimension_numbers = #tpu.dot_dimension_numbers<[1], [0], [0], [1], [0, 0, 1, 1], [], []>} : vector<32x256xbf16>, vector<256x128xbf16>, vector<32x128xf32> -> vector<32x128xf32>
    %c0_3 = arith.constant 0 : index
    %c0_4 = arith.constant 0 : index
    %3 = vector.load %arg3[%c0_3, %c0_4] : memref<1x128xf32, #tpu.memory_space<vmem>>, vector<1x128xf32>
    %4 = vector.broadcast %3 : vector<1x128xf32> to vector<32x128xf32>
    %5 = arith.addf %2, %4 : vector<32x128xf32>
    %6 = arith.truncf %5 : vector<32x128xf32> to vector<32x128xbf16>
    %c0_5 = arith.constant 0 : index
    %c0_6 = arith.constant 0 : index
    %7 = vector.load %arg4[%c0_5, %c0_6] : memref<32x128xbf16, #tpu.memory_space<vmem>>, vector<32x128xbf16>
    tpu.vector_store %arg4[%c0_5, %c0_6], %6 {strides = array<i32>} : memref<32x128xbf16, #tpu.memory_space<vmem>>, vector<32x128xbf16>,
    return
  }
  func.func @transform_0(%arg0: i32) -> (i32, i32) {
    %c0_i32 = arith.constant 0 : i32
    %c0_i32_0 = arith.constant 0 : i32
    return %arg0, %c0_i32 : i32, i32
  }
  func.func @transform_1(%arg0: i32) -> (i32, i32) {
    %c0_i32 = arith.constant 0 : i32
    %c0_i32_0 = arith.constant 0 : i32
    %c0_i32_1 = arith.constant 0 : i32
    return %c0_i32, %c0_i32_0 : i32, i32
  }
  func.func @transform_2(%arg0: i32) -> (i32, i32) {
    %c0_i32 = arith.constant 0 : i32
    %c0_i32_0 = arith.constant 0 : i32
    %c0_i32_1 = arith.constant 0 : i32
    return %c0_i32, %c0_i32_0 : i32, i32
  }
  func.func @transform_3(%arg0: i32) -> (i32, i32) {
    %c0_i32 = arith.constant 0 : i32
    %c0_i32_0 = arith.constant 0 : i32
    return %arg0, %c0_i32 : i32, i32
  }
}

</mosaic_0001>

<llo_original>
// kernel: tpu_custom_call.1
$region0: #{tpu_custom_call.1}
  #allocation0 [shape = 'u32[]', space=smem, size = 0x4, offset = 0x4, fixed_abs, tag = 'smem constant byte address 0x4 - core index']
  #allocation1 [shape = 'u32[72,128]{1,0:T(1,128)}', space=vmem, size = 0x9000, scoped, tag = 'internal scratch']
  %s0 = inlined_call_operand.hbm [shape: f32[2,4,32,32], index: 0, kind: input, shape index: {}]
  %s1 = inlined_call_operand.hbm [shape: bf16[256,128], index: 1, kind: input, shape index: {}]
  %s2 = inlined_call_operand.vmem [shape: f32[1,128], index: 2, kind: input, shape index: {}]
  %s3 = inlined_call_operand.hbm [shape: bf16[2,16,128], index: 3, kind: output, shape index: {}]
  %s4 = sld [smem:[#allocation0]]
  $region53: #{tpu_custom_call.1} parent=0
    _
  %s6 = ssub.s32 1, %s4
  %s7 = scalar_select 0, %s6, %s4
  $region1: #{tpu_custom_call.1} parent=0
    #allocation2 [shape = 'u8[131072]{0}', space=vmem, size = 0x20000, scoped, tag = 'input window, operand 0']
    #allocation3 [shape = 's32[2]{0}', space=sflag, size = 0x8, scoped, tag = 'scoped memory for tpu_custom_call.1']
    #allocation4 [shape = 's32[2]{0}', space=sflag, size = 0x8, scoped, tag = 'scoped memory for tpu_custom_call.1']
    #allocation5 [shape = 'u8[65536]{0}', space=vmem, size = 0x10000, scoped, tag = 'input window, operand 1, single buffered']
    #allocation6 [shape = 's32[1]{0}', space=sflag, size = 0x4, scoped, tag = 'scoped memory for tpu_custom_call.1']
    #allocation7 [shape = 'u8[8192]{0}', space=vmem, size = 0x2000, scoped, tag = 'output window, operand 0']
    %8 = vsyncpa [#allocation3], 0
    %s9 = scalar_lea.sflag [#allocation3], 1
    %10 = vsyncpa %s9, 0
    %11 = vsyncpa [#allocation6], 0
    %12 = vsyncpa [#allocation4], 0
    %s13 = scalar_lea.sflag [#allocation4], 1
    %14 = vsyncpa %s13, 0
    loop: start=0, step=1, limit=4
    $region2: #{tpu_custom_call.1} parent=1 // loop_pre_header
      _
    $region3: #{tpu_custom_call.1} parent=1 // loop_header
      %s16 = sphi 0, %s20
      %p17 = scmp.ge.s32.totalorder %s16, 4
      %s23 = sphi 0, %s35
      %s24 = sphi 0, %s31
      %s25 = sphi 0, %s23
      %s26 = sphi 0, %s24
      %s27 = sphi 0, %s25
      %s28 = sphi 0, %s26
      %s40 = sphi 0, %s42
      %s43 = sphi 0, %s40
      %s44 = sphi 0, %s43
      %s60 = sphi 0, %s44
      %s64 = sphi 0, %s64
      %s66 = sphi 0, %s64
      %s67 = sphi 0, %s66
      %s81 = sphi 0, %s67
      %s85 = sphi 0, %s85
      %s87 = sphi 0, %s85
      %s88 = sphi 0, %s87
      %s102 = sphi 0, %s88
      %s110 = sphi 0, %s112
      %s113 = sphi 0, %s110
      %s114 = sphi 0, %s113
      %s130 = sphi 0, %s114
    $region4: #{tpu_custom_call.1} parent=1 // loop_header_branch
      %19 = sbr.rel (%p17) target = $region8
    $region5: #{tpu_custom_call.1} parent=1 // loop_body
      %s21 = ssub.s32 %s16, 1
      %s22 = ssub.s32 %s16, 2
      %s29 = sadd.s32 1, %s24
      %p30 = scmp.ge.s32.totalorder %s29, 1
      %s31 = scalar_select %p30, 0, %s29
      %s32 = sadd.s32 1, %s23
      %s33 = scalar_select %p30, %s32, %s23
      %p34 = scmp.ge.s32.totalorder %s33, 2
      %s35 = scalar_select %p34, 0, %s33
      %s36 = ssub.s32 %s23, %s35
      %s37 = ssub.s32 %s24, %s31
      %s38 = sor.u32 %s36, %s37
      %p39 = scmp.eq.s32.totalorder %s38, 0
      %s41 = sadd.s32 %s40, 1
      %s42 = scalar_select %p39, %s40, %s41
      %p45 = pneg %p39
      %p46 = scmp.eq.s32.totalorder %s16, 1
      %p47 = por %p45, %p46
      %p48 = scmp.ne.s32.totalorder %s40, %s43
      %p49 = scmp.eq.s32.totalorder %s16, 0
      %p50 = por %p48, %p49
      %p51 = scmp.ne.s32.totalorder %s40, %s43
      %p52 = scmp.eq.s32.totalorder %s21, 1
      %p53 = por %p51, %p52
      %p54 = scmp.ne.s32.totalorder %s43, %s44
      %p55 = scmp.eq.s32.totalorder %s21, 0
      %p56 = por %p54, %p55
      %p57 = scmp.ne.s32.totalorder %s43, %s44
      %p58 = scmp.eq.s32.totalorder %s22, 1
      %p59 = por %p57, %p58
      %p61 = scmp.ne.s32.totalorder %s44, %s60
      %p62 = scmp.eq.s32.totalorder %s22, 0
      %p63 = por %p61, %p62
      %s65 = sadd.s32 %s64, 1
      %p68 = scmp.eq.s32.totalorder %s16, 1
      %p69 = scmp.ne.s32.totalorder %s64, %s66
      %p70 = scmp.eq.s32.totalorder %s16, 0
      %p71 = por %p69, %p70
      %p72 = scmp.ne.s32.totalorder %s64, %s66
      %p73 = scmp.eq.s32.totalorder %s21, 1
      %p74 = por %p72, %p73
      %p75 = scmp.ne.s32.totalorder %s66, %s67
      %p76 = scmp.eq.s32.totalorder %s21, 0
      %p77 = por %p75, %p76
      %p78 = scmp.ne.s32.totalorder %s66, %s67
      %p79 = scmp.eq.s32.totalorder %s22, 1
      %p80 = por %p78, %p79
      %p82 = scmp.ne.s32.totalorder %s67, %s81
      %p83 = scmp.eq.s32.totalorder %s22, 0
      %p84 = por %p82, %p83
      %s86 = sadd.s32 %s85, 1
      %p89 = scmp.eq.s32.totalorder %s16, 1
      %p90 = scmp.ne.s32.totalorder %s85, %s87
      %p91 = scmp.eq.s32.totalorder %s16, 0
      %p92 = por %p90, %p91
      %p93 = scmp.ne.s32.totalorder %s85, %s87
      %p94 = scmp.eq.s32.totalorder %s21, 1
      %p95 = por %p93, %p94
      %p96 = scmp.ne.s32.totalorder %s87, %s88
      %p97 = scmp.eq.s32.totalorder %s21, 0
      %p98 = por %p96, %p97
      %p99 = scmp.ne.s32.totalorder %s87, %s88
      %p100 = scmp.eq.s32.totalorder %s22, 1
      %p101 = por %p99, %p100
      %p103 = scmp.ne.s32.totalorder %s88, %s102
      %p104 = scmp.eq.s32.totalorder %s22, 0
      %p105 = por %p103, %p104
      %s106 = ssub.s32 %s23, %s35
      %s107 = ssub.s32 %s24, %s31
      %s108 = sor.u32 %s106, %s107
      %p109 = scmp.eq.s32.totalorder %s108, 0
      %s111 = sadd.s32 %s110, 1
      %s112 = scalar_select %p109, %s110, %s111
      %p115 = pneg %p109
      %p116 = scmp.eq.s32.totalorder %s16, 1
      %p117 = por %p115, %p116
      %p118 = scmp.ne.s32.totalorder %s110, %s113
      %p119 = scmp.eq.s32.totalorder %s16, 0
      %p120 = por %p118, %p119
      %p121 = scmp.ne.s32.totalorder %s110, %s113
      %p122 = scmp.eq.s32.totalorder %s21, 1
      %p123 = por %p121, %p122
      %p124 = scmp.ne.s32.totalorder %s113, %s114
      %p125 = scmp.eq.s32.totalorder %s21, 0
      %p126 = por %p124, %p125
      %p127 = scmp.ne.s32.totalorder %s113, %s114
      %p128 = scmp.eq.s32.totalorder %s22, 1
      %p129 = por %p127, %p128
      %p131 = scmp.ne.s32.totalorder %s114, %s130
      %p132 = scmp.eq.s32.totalorder %s22, 0
      %p133 = por %p131, %p132
      %p134 = scmp.le.s32.totalorder 1, %s16
      %p135 = scmp.lt.s32.totalorder %s16, 3
      %p136 = pnand %p134, %p135
      %p137 = pneg %p136
      // Predicated region
      $region9: #{tpu_custom_call.1} parent=5 // pred_check
        _
      $region10: #{tpu_custom_call.1} parent=5 // pred_check_branch
        %139 = sbr.rel (%p136) target = $region12
      $region11: #{tpu_custom_call.1} parent=5 // pred_region
        %s140 = ssub.s32 %s16, 1
        // Predicated region
        $region13: #{tpu_custom_call.1} parent=11 // pred_check
          %p141 = pneg %p77
        $region14: #{tpu_custom_call.1} parent=11 // pred_check_branch
          %143 = sbr.rel (%p141) target = $region16
        $region15: #{tpu_custom_call.1} parent=11 // pred_region
          %145 = vsyncadd [#allocation6], 0
          %s146 = sshll.u32 %s1, 4
          %s147 = int_to_ptr.hbm [resolvable:$true] %s146
          %s148 = sshll.u32 [#allocation5], 4
          %s149 = int_to_ptr.vmem [resolvable:$true] %s148
          %154 = dma.hbm_to_vmem [thread:$0]  %s147, 2048, %s149, [#allocation6], 64, 64, 4
        $region16: #{tpu_custom_call.1} parent=11 // pred_fallthru
          _
        // Predicated region
        $region17: #{tpu_custom_call.1} parent=11 // pred_check
          %p155 = pneg %p98
        $region18: #{tpu_custom_call.1} parent=11 // pred_check_branch
          %157 = sbr.rel (%p155) target = $region20
        $region19: #{tpu_custom_call.1} parent=11 // pred_region
          _
        $region20: #{tpu_custom_call.1} parent=11 // pred_fallthru
          _
      $region12: #{tpu_custom_call.1} parent=5 // pred_fallthru
        _
      %p158 = scmp.lt.s32.totalorder %s16, 2
      // Predicated region
      $region21: #{tpu_custom_call.1} parent=5 // pred_check
        %p159 = pneg %p158
      $region22: #{tpu_custom_call.1} parent=5 // pred_check_branch
        %161 = sbr.rel (%p159) target = $region24
      $region23: #{tpu_custom_call.1} parent=5 // pred_region
        // Predicated region
        $region25: #{tpu_custom_call.1} parent=23 // pred_check
          %p162 = pneg %p50
        $region26: #{tpu_custom_call.1} parent=23 // pred_check_branch
          %164 = sbr.rel (%p162) target = $region28
        $region27: #{tpu_custom_call.1} parent=23 // pred_region
          %s165 = sand.u32 %s40, 1
          %s166 = scalar_lea.sflag [#allocation3], %s165
          %s167 = sand.u32 %s40, 1
          %s168 = smul.addr %s167, 128
          %s169 = scalar_lea.vmem [#allocation2], %s168
          %s170 = smul.u32 4, %s24
          %172 = vsyncadd %s166, 0
          %s173 = smul.addr %s23, 16
          %s174 = sadd.s32 %s170, %s173
          %s175 = smul.addr %s174, 8
          %s176 = scalar_lea.hbm %s0, %s175
          %s177 = sshll.u32 %s176, 4
          %s178 = int_to_ptr.hbm [resolvable:$true] %s177
          %s179 = sshll.u32 %s169, 4
          %s180 = int_to_ptr.vmem [resolvable:$true] %s179
          %185 = dma.hbm_to_vmem [thread:$0]  %s178, 2048, %s180, %s166, 128, 128, 8
        $region28: #{tpu_custom_call.1} parent=23 // pred_fallthru
          _
      $region24: #{tpu_custom_call.1} parent=5 // pred_fallthru
        _
      %p186 = scmp.le.s32.totalorder 1, %s16
      %p187 = scmp.lt.s32.totalorder %s16, 3
      %p188 = pnand %p186, %p187
      %p189 = pneg %p188
      // Predicated region
      $region29: #{tpu_custom_call.1} parent=5 // pred_check
        _
      $region30: #{tpu_custom_call.1} parent=5 // pred_check_branch
        %191 = sbr.rel (%p188) target = $region32
      $region31: #{tpu_custom_call.1} parent=5 // pred_region
        %s192 = ssub.s32 %s16, 1
        %s193 = sand.u32 %s43, 1
        %s194 = scalar_lea.sflag [#allocation3], %s193
        %s195 = sand.u32 %s43, 1
        %s196 = smul.addr %s195, 128
        %s197 = scalar_lea.vmem [#allocation2], %s196
        // Predicated region
        $region33: #{tpu_custom_call.1} parent=31 // pred_check
          %p198 = pneg %p56
        $region34: #{tpu_custom_call.1} parent=31 // pred_check_branch
          %200 = sbr.rel (%p198) target = $region36
        $region35: #{tpu_custom_call.1} parent=31 // pred_region
          %202 = dma.done %s194, 2048
        $region36: #{tpu_custom_call.1} parent=31 // pred_fallthru
          _
        // Predicated region
        $region37: #{tpu_custom_call.1} parent=31 // pred_check
          %p203 = pneg %p77
        $region38: #{tpu_custom_call.1} parent=31 // pred_check_branch
          %205 = sbr.rel (%p203) target = $region40
        $region39: #{tpu_custom_call.1} parent=31 // pred_region
          %207 = dma.done [#allocation6], 2048
        $region40: #{tpu_custom_call.1} parent=31 // pred_fallthru
          _
        %s208 = sand.u32 %s43, 1
        %s209 = scalar_lea.sflag [#allocation3], %s208
        %s210 = sand.u32 %s43, 1
        %s211 = smul.addr %s210, 128
        %s212 = scalar_lea.vmem [#allocation2], %s211
        %p213 = pneg %p56
        %p214 = pneg %p53
        %p215 = pneg %p77
        %p216 = pneg %p74
        %p217 = pneg %p98
        %p218 = pneg %p95
        %p219 = pneg %p126
        %p220 = pneg %p123
        %s221 = sand.u32 %s113, 1
        %s222 = scalar_lea.sflag [#allocation4], %s221
        %s223 = sand.u32 %s113, 1
        %s224 = smul.addr %s223, 8
        %s225 = scalar_lea.vmem [#allocation7], %s224
        %s226 = smul.u32 4, %s26
        %s227 = smul.u32 2, %s26
        %v228 = vld [vmem:[%s197] sm:$0xff]
        %v229 = vld [vmem:[%s197 + $0x20] sm:$0xff]
        %v230 = vld [vmem:[%s197 + $0x40] sm:$0xff]
        %v231 = vld [vmem:[%s197 + $0x60] sm:$0xff]
        %232 = vxpose.xlu0.b32.start [1/16] %v228, 128
        %233 = vxpose.xlu0.b32.cont [2/16] %v229, 128
        %234 = vxpose.xlu0.b32.cont [3/16] %v230, 128
        %235 = vxpose.xlu0.b32.cont [4/16] %v231, 128
        %236 = vxpose.xlu0.b32.cont [5/16] 0.0, 128
        %237 = vxpose.xlu0.b32.cont [6/16] 0.0, 128
        %238 = vxpose.xlu0.b32.cont [7/16] 0.0, 128
        %239 = vxpose.xlu0.b32.cont [8/16] 0.0, 128
        %240 = vxpose.xlu0.b32.cont [9/16] 0.0, 128
        %241 = vxpose.xlu0.b32.cont [10/16] 0.0, 128
        %242 = vxpose.xlu0.b32.cont [11/16] 0.0, 128
        %243 = vxpose.xlu0.b32.cont [12/16] 0.0, 128
        %244 = vxpose.xlu0.b32.cont [13/16] 0.0, 128
        %245 = vxpose.xlu0.b32.cont [14/16] 0.0, 128
        %246 = vxpose.xlu0.b32.cont [15/16] 0.0, 128
        %247 = vxpose.xlu0.b32.end [16/16] 0.0, 128
        %v248 = vpop.trf.xlu0
        %v249 = vpop.trf.xlu0
        %v250 = vpop.trf.xlu0
        %v251 = vpop.trf.xlu0
        %v252 = vpop.trf.xlu0
        %v253 = vpop.trf.xlu0
        %v254 = vpop.trf.xlu0
        %v255 = vpop.trf.xlu0
        %v256 = vpop.trf.xlu0
        %v257 = vpop.trf.xlu0
        %v258 = vpop.trf.xlu0
        %v259 = vpop.trf.xlu0
        %v260 = vpop.trf.xlu0
        %v261 = vpop.trf.xlu0
        %v262 = vpop.trf.xlu0
        %v263 = vpop.trf.xlu0
        %v268 = vrot.slane %v249, 7
        %vm269 = vcmask 1041409
        %v270 = vsel %vm269, %v268, %v248
        %v271 = vrot.slane %v250, 6
        %vm272 = vcmask 1042434
        %v273 = vsel %vm272, %v271, %v270
        %v274 = vrot.slane %v251, 5
        %vm275 = vcmask 1043459
        %v276 = vsel %vm275, %v274, %v273
        %v278 = vrot.slane %v248, 1
        %v279 = vsel %vm269, %v249, %v278
        %v280 = vrot.slane %v250, 7
        %v281 = vsel %vm272, %v280, %v279
        %v282 = vrot.slane %v251, 6
        %v283 = vsel %vm275, %v282, %v281
        %284 = vrot.lane.b32.xlu0 %v283, 32
        %v285 = vpop.permute.xlu0 %284
        %v287 = vrot.slane %v248, 2
        %v288 = vrot.slane %v249, 1
        %v289 = vsel %vm269, %v288, %v287
        %v290 = vsel %vm272, %v250, %v289
        %v291 = vrot.slane %v251, 7
        %v292 = vsel %vm275, %v291, %v290
        %293 = vrot.lane.b32.xlu0 %v292, 64
        %v294 = vpop.permute.xlu0 %293
        %v296 = vrot.slane %v248, 3
        %v297 = vrot.slane %v249, 2
        %v298 = vsel %vm269, %v297, %v296
        %v299 = vrot.slane %v250, 1
        %v300 = vsel %vm272, %v299, %v298
        %v301 = vsel %vm275, %v251, %v300
        %302 = vrot.lane.b32.xlu0 %v301, 96
        %v303 = vpop.permute.xlu0 %302
        %v305 = vrot.slane %v248, 4
        %v306 = vrot.slane %v249, 3
        %v307 = vsel %vm269, %v306, %v305
        %v308 = vrot.slane %v250, 2
        %v309 = vsel %vm272, %v308, %v307
        %v310 = vrot.slane %v251, 1
        %v311 = vsel %vm275, %v310, %v309
        %v313 = vrot.slane %v248, 5
        %v314 = vrot.slane %v249, 4
        %v315 = vsel %vm269, %v314, %v313
        %v316 = vrot.slane %v250, 3
        %v317 = vsel %vm272, %v316, %v315
        %v318 = vrot.slane %v251, 2
        %v319 = vsel %vm275, %v318, %v317
        %320 = vrot.lane.b32.xlu0 %v319, 32
        %v321 = vpop.permute.xlu0 %320
        %v323 = vrot.slane %v248, 6
        %v324 = vrot.slane %v249, 5
        %v325 = vsel %vm269, %v324, %v323
        %v326 = vrot.slane %v250, 4
        %v327 = vsel %vm272, %v326, %v325
        %v328 = vrot.slane %v251, 3
        %v329 = vsel %vm275, %v328, %v327
        %330 = vrot.lane.b32.xlu0 %v329, 64
        %v331 = vpop.permute.xlu0 %330
        %v333 = vrot.slane %v248, 7
        %v334 = vrot.slane %v249, 6
        %v335 = vsel %vm269, %v334, %v333
        %v336 = vrot.slane %v250, 5
        %v337 = vsel %vm272, %v336, %v335
        %v338 = vrot.slane %v251, 4
        %v339 = vsel %vm275, %v338, %v337
        %340 = vrot.lane.b32.xlu0 %v339, 96
        %v341 = vpop.permute.xlu0 %340
        %vm343 = vcmask 261120
        %v344 = vsel %vm343, %v276, %v285
        %vm345 = vcmask 523264
        %v346 = vsel %vm345, %v344, %v294
        %vm347 = vcmask 785408
        %v348 = vsel %vm347, %v346, %v303
        %v349 = vsel %vm343, %v311, %v321
        %v350 = vsel %vm345, %v349, %v331
        %v351 = vsel %vm347, %v350, %v341
        %v352 = vld [vmem:[%s197 + $0x8] sm:$0xff]
        %v353 = vld [vmem:[%s197 + $0x28] sm:$0xff]
        %v354 = vld [vmem:[%s197 + $0x48] sm:$0xff]
        %v355 = vld [vmem:[%s197 + $0x68] sm:$0xff]
        %356 = vxpose.xlu0.b32.start [1/16] %v352, 128
        %357 = vxpose.xlu0.b32.cont [2/16] %v353, 128
        %358 = vxpose.xlu0.b32.cont [3/16] %v354, 128
        %359 = vxpose.xlu0.b32.cont [4/16] %v355, 128
        %360 = vxpose.xlu0.b32.cont [5/16] 0.0, 128
        %361 = vxpose.xlu0.b32.cont [6/16] 0.0, 128
        %362 = vxpose.xlu0.b32.cont [7/16] 0.0, 128
        %363 = vxpose.xlu0.b32.cont [8/16] 0.0, 128
        %364 = vxpose.xlu0.b32.cont [9/16] 0.0, 128
        %365 = vxpose.xlu0.b32.cont [10/16] 0.0, 128
        %366 = vxpose.xlu0.b32.cont [11/16] 0.0, 128
        %367 = vxpose.xlu0.b32.cont [12/16] 0.0, 128
        %368 = vxpose.xlu0.b32.cont [13/16] 0.0, 128
        %369 = vxpose.xlu0.b32.cont [14/16] 0.0, 128
        %370 = vxpose.xlu0.b32.cont [15/16] 0.0, 128
        %371 = vxpose.xlu0.b32.end [16/16] 0.0, 128
        %v372 = vpop.trf.xlu0
        %v373 = vpop.trf.xlu0
        %v374 = vpop.trf.xlu0
        %v375 = vpop.trf.xlu0
        %v376 = vpop.trf.xlu0
        %v377 = vpop.trf.xlu0
        %v378 = vpop.trf.xlu0
        %v379 = vpop.trf.xlu0
        %v380 = vpop.trf.xlu0
        %v381 = vpop.trf.xlu0
        %v382 = vpop.trf.xlu0
        %v383 = vpop.trf.xlu0
        %v384 = vpop.trf.xlu0
        %v385 = vpop.trf.xlu0
        %v386 = vpop.trf.xlu0
        %v387 = vpop.trf.xlu0
        %v392 = vrot.slane %v373, 7
        %v393 = vsel %vm269, %v392, %v372
        %v394 = vrot.slane %v374, 6
        %v395 = vsel %vm272, %v394, %v393
        %v396 = vrot.slane %v375, 5
        %v397 = vsel %vm275, %v396, %v395
        %v399 = vrot.slane %v372, 1
        %v400 = vsel %vm269, %v373, %v399
        %v401 = vrot.slane %v374, 7
        %v402 = vsel %vm272, %v401, %v400
        %v403 = vrot.slane %v375, 6
        %v404 = vsel %vm275, %v403, %v402
        %405 = vrot.lane.b32.xlu0 %v404, 32
        %v406 = vpop.permute.xlu0 %405
        %v408 = vrot.slane %v372, 2
        %v409 = vrot.slane %v373, 1
        %v410 = vsel %vm269, %v409, %v408
        %v411 = vsel %vm272, %v374, %v410
        %v412 = vrot.slane %v375, 7
        %v413 = vsel %vm275, %v412, %v411
        %414 = vrot.lane.b32.xlu0 %v413, 64
        %v415 = vpop.permute.xlu0 %414
        %v417 = vrot.slane %v372, 3
        %v418 = vrot.slane %v373, 2
        %v419 = vsel %vm269, %v418, %v417
        %v420 = vrot.slane %v374, 1
        %v421 = vsel %vm272, %v420, %v419
        %v422 = vsel %vm275, %v375, %v421
        %423 = vrot.lane.b32.xlu0 %v422, 96
        %v424 = vpop.permute.xlu0 %423
        %v426 = vrot.slane %v372, 4
        %v427 = vrot.slane %v373, 3
        %v428 = vsel %vm269, %v427, %v426
        %v429 = vrot.slane %v374, 2
        %v430 = vsel %vm272, %v429, %v428
        %v431 = vrot.slane %v375, 1
        %v432 = vsel %vm275, %v431, %v430
        %v434 = vrot.slane %v372, 5
        %v435 = vrot.slane %v373, 4
        %v436 = vsel %vm269, %v435, %v434
        %v437 = vrot.slane %v374, 3
        %v438 = vsel %vm272, %v437, %v436
        %v439 = vrot.slane %v375, 2
        %v440 = vsel %vm275, %v439, %v438
        %441 = vrot.lane.b32.xlu0 %v440, 32
        %v442 = vpop.permute.xlu0 %441
        %v444 = vrot.slane %v372, 6
        %v445 = vrot.slane %v373, 5
        %v446 = vsel %vm269, %v445, %v444
        %v447 = vrot.slane %v374, 4
        %v448 = vsel %vm272, %v447, %v446
        %v449 = vrot.slane %v375, 3
        %v450 = vsel %vm275, %v449, %v448
        %451 = vrot.lane.b32.xlu0 %v450, 64
        %v452 = vpop.permute.xlu0 %451
        %v454 = vrot.slane %v372, 7
        %v455 = vrot.slane %v373, 6
        %v456 = vsel %vm269, %v455, %v454
        %v457 = vrot.slane %v374, 5
        %v458 = vsel %vm272, %v457, %v456
        %v459 = vrot.slane %v375, 4
        %v460 = vsel %vm275, %v459, %v458
        %461 = vrot.lane.b32.xlu0 %v460, 96
        %v462 = vpop.permute.xlu0 %461
        %v464 = vsel %vm343, %v397, %v406
        %v465 = vsel %vm345, %v464, %v415
        %v466 = vsel %vm347, %v465, %v424
        %v467 = vsel %vm343, %v432, %v442
        %v468 = vsel %vm345, %v467, %v452
        %v469 = vsel %vm347, %v468, %v462
        %v470 = vld [vmem:[%s197 + $0x10] sm:$0xff]
        %v471 = vld [vmem:[%s197 + $0x30] sm:$0xff]
        %v472 = vld [vmem:[%s197 + $0x50] sm:$0xff]
        %v473 = vld [vmem:[%s197 + $0x70] sm:$0xff]
        %474 = vxpose.xlu0.b32.start [1/16] %v470, 128
        %475 = vxpose.xlu0.b32.cont [2/16] %v471, 128
        %476 = vxpose.xlu0.b32.cont [3/16] %v472, 128
        %477 = vxpose.xlu0.b32.cont [4/16] %v473, 128
        %478 = vxpose.xlu0.b32.cont [5/16] 0.0, 128
        %479 = vxpose.xlu0.b32.cont [6/16] 0.0, 128
        %480 = vxpose.xlu0.b32.cont [7/16] 0.0, 128
        %481 = vxpose.xlu0.b32.cont [8/16] 0.0, 128
        %482 = vxpose.xlu0.b32.cont [9/16] 0.0, 128
        %483 = vxpose.xlu0.b32.cont [10/16] 0.0, 128
        %484 = vxpose.xlu0.b32.cont [11/16] 0.0, 128
        %485 = vxpose.xlu0.b32.cont [12/16] 0.0, 128
        %486 = vxpose.xlu0.b32.cont [13/16] 0.0, 128
        %487 = vxpose.xlu0.b32.cont [14/16] 0.0, 128
        %488 = vxpose.xlu0.b32.cont [15/16] 0.0, 128
        %489 = vxpose.xlu0.b32.end [16/16] 0.0, 128
        %v490 = vpop.trf.xlu0
        %v491 = vpop.trf.xlu0
        %v492 = vpop.trf.xlu0
        %v493 = vpop.trf.xlu0
        %v494 = vpop.trf.xlu0
        %v495 = vpop.trf.xlu0
        %v496 = vpop.trf.xlu0
        %v497 = vpop.trf.xlu0
        %v498 = vpop.trf.xlu0
        %v499 = vpop.trf.xlu0
        %v500 = vpop.trf.xlu0
        %v501 = vpop.trf.xlu0
        %v502 = vpop.trf.xlu0
        %v503 = vpop.trf.xlu0
        %v504 = vpop.trf.xlu0
        %v505 = vpop.trf.xlu0
        %v510 = vrot.slane %v491, 7
        %v511 = vsel %vm269, %v510, %v490
        %v512 = vrot.slane %v492, 6
        %v513 = vsel %vm272, %v512, %v511
        %v514 = vrot.slane %v493, 5
        %v515 = vsel %vm275, %v514, %v513
        %v517 = vrot.slane %v490, 1
        %v518 = vsel %vm269, %v491, %v517
        %v519 = vrot.slane %v492, 7
        %v520 = vsel %vm272, %v519, %v518
        %v521 = vrot.slane %v493, 6
        %v522 = vsel %vm275, %v521, %v520
        %523 = vrot.lane.b32.xlu0 %v522, 32
        %v524 = vpop.permute.xlu0 %523
        %v526 = vrot.slane %v490, 2
        %v527 = vrot.slane %v491, 1
        %v528 = vsel %vm269, %v527, %v526
        %v529 = vsel %vm272, %v492, %v528
        %v530 = vrot.slane %v493, 7
        %v531 = vsel %vm275, %v530, %v529
        %532 = vrot.lane.b32.xlu0 %v531, 64
        %v533 = vpop.permute.xlu0 %532
        %v535 = vrot.slane %v490, 3
        %v536 = vrot.slane %v491, 2
        %v537 = vsel %vm269, %v536, %v535
        %v538 = vrot.slane %v492, 1
        %v539 = vsel %vm272, %v538, %v537
        %v540 = vsel %vm275, %v493, %v539
        %541 = vrot.lane.b32.xlu0 %v540, 96
        %v542 = vpop.permute.xlu0 %541
        %v544 = vrot.slane %v490, 4
        %v545 = vrot.slane %v491, 3
        %v546 = vsel %vm269, %v545, %v544
        %v547 = vrot.slane %v492, 2
        %v548 = vsel %vm272, %v547, %v546
        %v549 = vrot.slane %v493, 1
        %v550 = vsel %vm275, %v549, %v548
        %v552 = vrot.slane %v490, 5
        %v553 = vrot.slane %v491, 4
        %v554 = vsel %vm269, %v553, %v552
        %v555 = vrot.slane %v492, 3
        %v556 = vsel %vm272, %v555, %v554
        %v557 = vrot.slane %v493, 2
        %v558 = vsel %vm275, %v557, %v556
        %559 = vrot.lane.b32.xlu0 %v558, 32
        %v560 = vpop.permute.xlu0 %559
        %v562 = vrot.slane %v490, 6
        %v563 = vrot.slane %v491, 5
        %v564 = vsel %vm269, %v563, %v562
        %v565 = vrot.slane %v492, 4
        %v566 = vsel %vm272, %v565, %v564
        %v567 = vrot.slane %v493, 3
        %v568 = vsel %vm275, %v567, %v566
        %569 = vrot.lane.b32.xlu0 %v568, 64
        %v570 = vpop.permute.xlu0 %569
        %v572 = vrot.slane %v490, 7
        %v573 = vrot.slane %v491, 6
        %v574 = vsel %vm269, %v573, %v572
        %v575 = vrot.slane %v492, 5
        %v576 = vsel %vm272, %v575, %v574
        %v577 = vrot.slane %v493, 4
        %v578 = vsel %vm275, %v577, %v576
        %579 = vrot.lane.b32.xlu0 %v578, 96
        %v580 = vpop.permute.xlu0 %579
        %v582 = vsel %vm343, %v515, %v524
        %v583 = vsel %vm345, %v582, %v533
        %v584 = vsel %vm347, %v583, %v542
        %v585 = vsel %vm343, %v550, %v560
        %v586 = vsel %vm345, %v585, %v570
        %v587 = vsel %vm347, %v586, %v580
        %v588 = vld [vmem:[%s197 + $0x18] sm:$0xff]
        %v589 = vld [vmem:[%s197 + $0x38] sm:$0xff]
        %v590 = vld [vmem:[%s197 + $0x58] sm:$0xff]
        %v591 = vld [vmem:[%s197 + $0x78] sm:$0xff]
        %592 = vxpose.xlu0.b32.start [1/16] %v588, 128
        %593 = vxpose.xlu0.b32.cont [2/16] %v589, 128
        %594 = vxpose.xlu0.b32.cont [3/16] %v590, 128
        %595 = vxpose.xlu0.b32.cont [4/16] %v591, 128
        %596 = vxpose.xlu0.b32.cont [5/16] 0.0, 128
        %597 = vxpose.xlu0.b32.cont [6/16] 0.0, 128
        %598 = vxpose.xlu0.b32.cont [7/16] 0.0, 128
        %599 = vxpose.xlu0.b32.cont [8/16] 0.0, 128
        %600 = vxpose.xlu0.b32.cont [9/16] 0.0, 128
        %601 = vxpose.xlu0.b32.cont [10/16] 0.0, 128
        %602 = vxpose.xlu0.b32.cont [11/16] 0.0, 128
        %603 = vxpose.xlu0.b32.cont [12/16] 0.0, 128
        %604 = vxpose.xlu0.b32.cont [13/16] 0.0, 128
        %605 = vxpose.xlu0.b32.cont [14/16] 0.0, 128
        %606 = vxpose.xlu0.b32.cont [15/16] 0.0, 128
        %607 = vxpose.xlu0.b32.end [16/16] 0.0, 128
        %v608 = vpop.trf.xlu0
        %v609 = vpop.trf.xlu0
        %v610 = vpop.trf.xlu0
        %v611 = vpop.trf.xlu0
        %v612 = vpop.trf.xlu0
        %v613 = vpop.trf.xlu0
        %v614 = vpop.trf.xlu0
        %v615 = vpop.trf.xlu0
        %v616 = vpop.trf.xlu0
        %v617 = vpop.trf.xlu0
        %v618 = vpop.trf.xlu0
        %v619 = vpop.trf.xlu0
        %v620 = vpop.trf.xlu0
        %v621 = vpop.trf.xlu0
        %v622 = vpop.trf.xlu0
        %v623 = vpop.trf.xlu0
        %v628 = vrot.slane %v609, 7
        %v629 = vsel %vm269, %v628, %v608
        %v630 = vrot.slane %v610, 6
        %v631 = vsel %vm272, %v630, %v629
        %v632 = vrot.slane %v611, 5
        %v633 = vsel %vm275, %v632, %v631
        %v635 = vrot.slane %v608, 1
        %v636 = vsel %vm269, %v609, %v635
        %v637 = vrot.slane %v610, 7
        %v638 = vsel %vm272, %v637, %v636
        %v639 = vrot.slane %v611, 6
        %v640 = vsel %vm275, %v639, %v638
        %641 = vrot.lane.b32.xlu0 %v640, 32
        %v642 = vpop.permute.xlu0 %641
        %v644 = vrot.slane %v608, 2
        %v645 = vrot.slane %v609, 1
        %v646 = vsel %vm269, %v645, %v644
        %v647 = vsel %vm272, %v610, %v646
        %v648 = vrot.slane %v611, 7
        %v649 = vsel %vm275, %v648, %v647
        %650 = vrot.lane.b32.xlu0 %v649, 64
        %v651 = vpop.permute.xlu0 %650
        %v653 = vrot.slane %v608, 3
        %v654 = vrot.slane %v609, 2
        %v655 = vsel %vm269, %v654, %v653
        %v656 = vrot.slane %v610, 1
        %v657 = vsel %vm272, %v656, %v655
        %v658 = vsel %vm275, %v611, %v657
        %659 = vrot.lane.b32.xlu0 %v658, 96
        %v660 = vpop.permute.xlu0 %659
        %v662 = vrot.slane %v608, 4
        %v663 = vrot.slane %v609, 3
        %v664 = vsel %vm269, %v663, %v662
        %v665 = vrot.slane %v610, 2
        %v666 = vsel %vm272, %v665, %v664
        %v667 = vrot.slane %v611, 1
        %v668 = vsel %vm275, %v667, %v666
        %v670 = vrot.slane %v608, 5
        %v671 = vrot.slane %v609, 4
        %v672 = vsel %vm269, %v671, %v670
        %v673 = vrot.slane %v610, 3
        %v674 = vsel %vm272, %v673, %v672
        %v675 = vrot.slane %v611, 2
        %v676 = vsel %vm275, %v675, %v674
        %677 = vrot.lane.b32.xlu0 %v676, 32
        %v678 = vpop.permute.xlu0 %677
        %v680 = vrot.slane %v608, 6
        %v681 = vrot.slane %v609, 5
        %v682 = vsel %vm269, %v681, %v680
        %v683 = vrot.slane %v610, 4
        %v684 = vsel %vm272, %v683, %v682
        %v685 = vrot.slane %v611, 3
        %v686 = vsel %vm275, %v685, %v684
        %687 = vrot.lane.b32.xlu0 %v686, 64
        %v688 = vpop.permute.xlu0 %687
        %v690 = vrot.slane %v608, 7
        %v691 = vrot.slane %v609, 6
        %v692 = vsel %vm269, %v691, %v690
        %v693 = vrot.slane %v610, 5
        %v694 = vsel %vm272, %v693, %v692
        %v695 = vrot.slane %v611, 4
        %v696 = vsel %vm275, %v695, %v694
        %697 = vrot.lane.b32.xlu0 %v696, 96
        %v698 = vpop.permute.xlu0 %697
        %v700 = vsel %vm343, %v633, %v642
        %v701 = vsel %vm345, %v700, %v651
        %v702 = vsel %vm347, %v701, %v660
        %v703 = vsel %vm343, %v668, %v678
        %v704 = vsel %vm345, %v703, %v688
        %v705 = vsel %vm347, %v704, %v698
        %v708 = vrot.slane %v466, 4
        %v709 = vrot.slane %v469, 4
        %v714 = vrot.slane %v702, 4
        %v715 = vrot.slane %v705, 4
        %vm718 = vcmask 1043456
        %v719 = vsel %vm718, %v348, %v708
        %v720 = vsel %vm718, %v351, %v709
        %v721 = vsel %vm718, %v584, %v714
        %v722 = vsel %vm718, %v587, %v715
        %v723 = vpack.c.bf16 %v721, %v719
        %v724 = vpack.c.bf16 %v722, %v720
        %v725 = vld [vmem:[#allocation5] sm:$0xf]
        %v726 = vld [vmem:[#allocation5 + $0x4] sm:$0xf]
        %v727 = vld [vmem:[#allocation5 + $0x8] sm:$0xf]
        %v728 = vld [vmem:[#allocation5 + $0xc] sm:$0xf]
        %v729 = vld [vmem:[#allocation5 + $0x10] sm:$0xf]
        %v730 = vld [vmem:[#allocation5 + $0x14] sm:$0xf]
        %v731 = vld [vmem:[#allocation5 + $0x18] sm:$0xf]
        %v732 = vld [vmem:[#allocation5 + $0x1c] sm:$0xf]
        %v733 = vld [vmem:[#allocation5 + $0x20] sm:$0xf]
        %v734 = vld [vmem:[#allocation5 + $0x24] sm:$0xf]
        %v735 = vld [vmem:[#allocation5 + $0x28] sm:$0xf]
        %v736 = vld [vmem:[#allocation5 + $0x2c] sm:$0xf]
        %v737 = vld [vmem:[#allocation5 + $0x30] sm:$0xf]
        %v738 = vld [vmem:[#allocation5 + $0x34] sm:$0xf]
        %v739 = vld [vmem:[#allocation5 + $0x38] sm:$0xf]
        %v740 = vld [vmem:[#allocation5 + $0x3c] sm:$0xf]
        %v741 = vld [vmem:[#allocation5 + $0x40] sm:$0xf]
        %v742 = vld [vmem:[#allocation5 + $0x44] sm:$0xf]
        %v743 = vld [vmem:[#allocation5 + $0x48] sm:$0xf]
        %v744 = vld [vmem:[#allocation5 + $0x4c] sm:$0xf]
        %v745 = vld [vmem:[#allocation5 + $0x50] sm:$0xf]
        %v746 = vld [vmem:[#allocation5 + $0x54] sm:$0xf]
        %v747 = vld [vmem:[#allocation5 + $0x58] sm:$0xf]
        %v748 = vld [vmem:[#allocation5 + $0x5c] sm:$0xf]
        %v749 = vld [vmem:[#allocation5 + $0x60] sm:$0xf]
        %v750 = vld [vmem:[#allocation5 + $0x64] sm:$0xf]
        %v751 = vld [vmem:[#allocation5 + $0x68] sm:$0xf]
        %v752 = vld [vmem:[#allocation5 + $0x6c] sm:$0xf]
        %v753 = vld [vmem:[#allocation5 + $0x70] sm:$0xf]
        %v754 = vld [vmem:[#allocation5 + $0x74] sm:$0xf]
        %v755 = vld [vmem:[#allocation5 + $0x78] sm:$0xf]
        %v756 = vld [vmem:[#allocation5 + $0x7c] sm:$0xf]
        %v757 = vld [vmem:[%s2] sm:$0x1]
        %v759 = vperm.slane %v757, 0
        %v793 = vunpack.c.l.b16 %v725
        %v794 = vunpack.c.l.b16 %v726
        %v795 = vunpack.c.l.b16 %v727
        %v796 = vunpack.c.l.b16 %v728
        %v797 = vunpack.c.l.b16 %v729
        %v798 = vunpack.c.l.b16 %v730
        %v799 = vunpack.c.l.b16 %v731
        %v800 = vunpack.c.l.b16 %v732
        %v801 = vunpack.c.l.b16 %v733
        %v802 = vunpack.c.l.b16 %v734
        %v803 = vunpack.c.l.b16 %v735
        %v804 = vunpack.c.l.b16 %v736
        %v805 = vunpack.c.l.b16 %v737
        %v806 = vunpack.c.l.b16 %v738
        %v807 = vunpack.c.l.b16 %v739
        %v808 = vunpack.c.l.b16 %v740
        %v809 = vunpack.c.l.b16 %v741
        %v810 = vunpack.c.l.b16 %v742
        %v811 = vunpack.c.l.b16 %v743
        %v812 = vunpack.c.l.b16 %v744
        %v813 = vunpack.c.l.b16 %v745
        %v814 = vunpack.c.l.b16 %v746
        %v815 = vunpack.c.l.b16 %v747
        %v816 = vunpack.c.l.b16 %v748
        %v817 = vunpack.c.l.b16 %v749
        %v818 = vunpack.c.l.b16 %v750
        %v819 = vunpack.c.l.b16 %v751
        %v820 = vunpack.c.l.b16 %v752
        %v821 = vunpack.c.l.b16 %v753
        %v822 = vunpack.c.l.b16 %v754
        %v823 = vunpack.c.l.b16 %v755
        %v824 = vunpack.c.l.b16 %v756
        %v825 = vpack.c.b16 %v794, %v793
        %v826 = vpack.c.b16 %v796, %v795
        %v827 = vpack.c.b16 %v798, %v797
        %v828 = vpack.c.b16 %v800, %v799
        %v829 = vpack.c.b16 %v802, %v801
        %v830 = vpack.c.b16 %v804, %v803
        %v831 = vpack.c.b16 %v806, %v805
        %v832 = vpack.c.b16 %v808, %v807
        %v833 = vpack.c.b16 %v810, %v809
        %v834 = vpack.c.b16 %v812, %v811
        %v835 = vpack.c.b16 %v814, %v813
        %v836 = vpack.c.b16 %v816, %v815
        %v837 = vpack.c.b16 %v818, %v817
        %v838 = vpack.c.b16 %v820, %v819
        %v839 = vpack.c.b16 %v822, %v821
        %v840 = vpack.c.b16 %v824, %v823
        %857 = vmatpush.bf16.msra.mxu0 %v832
        %858 = vmatpush.bf16.msra.mxu0 %v831
        %859 = vmatpush.bf16.msra.mxu0 %v830
        %860 = vmatpush.bf16.msra.mxu0 %v829
        %861 = vmatpush.bf16.msra.mxu0 %v828
        %862 = vmatpush.bf16.msra.mxu0 %v827
        %863 = vmatpush.bf16.msra.mxu0 %v826
        %864 = vmatpush.bf16.msra.mxu0 %v825
        %865 = vmatmul.bf16.gmra.mxu0 %v723
        %v866 = vpop.f32.mrf.mxu0
        %v867 = vadd.f32 %v759, %v866
        %v868 = vpop.f32.mrf.mxu0
        %v869 = vadd.f32 %v759, %v868
        %870 = vdwg.mxu0
        %871 = vmatpush.bf16.msra.mxu0 %v840
        %872 = vmatpush.bf16.msra.mxu0 %v839
        %873 = vmatpush.bf16.msra.mxu0 %v838
        %874 = vmatpush.bf16.msra.mxu0 %v837
        %875 = vmatpush.bf16.msra.mxu0 %v836
        %876 = vmatpush.bf16.msra.mxu0 %v835
        %877 = vmatpush.bf16.msra.mxu0 %v834
        %878 = vmatpush.bf16.msra.mxu0 %v833
        %879 = vmatmul.bf16.gmra.mxu0 %v724
        %v880 = vpop.f32.mrf.mxu0
        %v881 = vadd.f32 %v867, %v880
        %v882 = vpop.f32.mrf.mxu0
        %v883 = vadd.f32 %v869, %v882
        %884 = vdwg.mxu0
        %v885 = vpack.c.bf16 %v881, %v881
        %v886 = vpack.c.bf16 %v883, %v883
        %887 = vst [vmem:[%s225] sm:$0xf] %v885
        %888 = vst [vmem:[%s225 + $0x4] sm:$0xf] %v886
        %s889 = sand.u32 %s113, 1
        %s890 = scalar_lea.sflag [#allocation4], %s889
        %s891 = sand.u32 %s113, 1
        %s892 = smul.addr %s891, 8
        %s893 = scalar_lea.vmem [#allocation7], %s892
        // Predicated region
        $region41: #{tpu_custom_call.1} parent=31 // pred_check
          %p894 = pneg %p123
        $region42: #{tpu_custom_call.1} parent=31 // pred_check_branch
          %896 = sbr.rel (%p894) target = $region44
        $region43: #{tpu_custom_call.1} parent=31 // pred_region
          %s897 = smul.u32 2, %s26
          %899 = vsyncadd %s890, 0
          %s900 = smul.addr %s25, 2
          %s901 = sadd.s32 %s897, %s900
          %s902 = smul.addr %s901, 4
          %s903 = scalar_lea.hbm %s3, %s902
          %s904 = sshll.u32 %s893, 4
          %s905 = int_to_ptr.vmem [resolvable:$true] %s904
          %s906 = sshll.u32 %s903, 4
          %s907 = int_to_ptr.hbm [resolvable:$true] %s906
          %912 = dma.vmem_to_hbm [thread:$0]  %s905, 128, %s907, %s890, 64, 64, 4
        $region44: #{tpu_custom_call.1} parent=31 // pred_fallthru
          _
      $region32: #{tpu_custom_call.1} parent=5 // pred_fallthru
        _
      %p913 = scmp.le.s32.totalorder 2, %s16
      // Predicated region
      $region45: #{tpu_custom_call.1} parent=5 // pred_check
        %p914 = pneg %p913
      $region46: #{tpu_custom_call.1} parent=5 // pred_check_branch
        %916 = sbr.rel (%p914) target = $region48
      $region47: #{tpu_custom_call.1} parent=5 // pred_region
        %s917 = ssub.s32 %s16, 2
        // Predicated region
        $region49: #{tpu_custom_call.1} parent=47 // pred_check
          %p918 = pneg %p129
        $region50: #{tpu_custom_call.1} parent=47 // pred_check_branch
          %920 = sbr.rel (%p918) target = $region52
        $region51: #{tpu_custom_call.1} parent=47 // pred_region
          %s921 = sand.u32 %s114, 1
          %s922 = scalar_lea.sflag [#allocation4], %s921
          %s923 = sand.u32 %s114, 1
          %s924 = smul.addr %s923, 8
          %s925 = scalar_lea.vmem [#allocation7], %s924
          %927 = dma.done %s922, 128
        $region52: #{tpu_custom_call.1} parent=47 // pred_fallthru
          _
      $region48: #{tpu_custom_call.1} parent=5 // pred_fallthru
        _
    $region6: #{tpu_custom_call.1} parent=1 // loop_footer
      %s20 = sadd.s32 1, %s16
    $region7: #{tpu_custom_call.1} parent=1 // loop_footer_branch
      %15 = sbr.rel target = $region3
    $region8: #{tpu_custom_call.1} parent=1 // loop_exit
      _
    %928 = vsyncpa [#allocation3], 1
    %s929 = scalar_lea.sflag [#allocation3], 1
    %930 = vsyncpa %s929, 1
    %931 = vsyncpa [#allocation6], 1
    %932 = vsyncpa [#allocation4], 1
    %s933 = scalar_lea.sflag [#allocation4], 1
    %934 = vsyncpa %s933, 1

// kernel: tpu_custom_call.1
$region0: #{tpu_custom_call.1}
  #allocation0 [shape = 'u32[]', space=smem, size = 0x4, offset = 0x4, fixed_abs, tag = 'smem constant byte address 0x4 - core index']
  #allocation1 [shape = 'u32[72,128]{1,0:T(1,128)}', space=vmem, size = 0x9000, scoped, tag = 'internal scratch']
  %s0 = inlined_call_operand.hbm [shape: f32[2,4,32,32], index: 0, kind: input, shape index: {}]
  %s1 = inlined_call_operand.hbm [shape: bf16[256,128], index: 1, kind: input, shape index: {}]
  %s2 = inlined_call_operand.vmem [shape: f32[1,128], index: 2, kind: input, shape index: {}]
  %s3 = inlined_call_operand.hbm [shape: bf16[2,16,128], index: 3, kind: output, shape index: {}]
  %s4 = sld [smem:[#allocation0]]
  $region53: #{tpu_custom_call.1} parent=0
    _
  %s6 = ssub.s32 1, %s4
  %s7 = scalar_select 0, %s6, %s4
  $region1: #{tpu_custom_call.1} parent=0
    #allocation2 [shape = 'u8[131072]{0}', space=vmem, size = 0x20000, scoped, tag = 'input window, operand 0']
    #allocation3 [shape = 's32[2]{0}', space=sflag, size = 0x8, scoped, tag = 'scoped memory for tpu_custom_call.1']
    #allocation4 [shape = 's32[2]{0}', space=sflag, size = 0x8, scoped, tag = 'scoped memory for tpu_custom_call.1']
    #allocation5 [shape = 'u8[65536]{0}', space=vmem, size = 0x10000, scoped, tag = 'input window, operand 1, single buffered']
    #allocation6 [shape = 's32[1]{0}', space=sflag, size = 0x4, scoped, tag = 'scoped memory for tpu_custom_call.1']
    #allocation7 [shape = 'u8[8192]{0}', space=vmem, size = 0x2000, scoped, tag = 'output window, operand 0']
    %8 = vsyncpa [#allocation3], 0
    %s9 = scalar_lea.sflag [#allocation3], 1
    %10 = vsyncpa %s9, 0
    %11 = vsyncpa [#allocation6], 0
    %12 = vsyncpa [#allocation4], 0
    %s13 = scalar_lea.sflag [#allocation4], 1
    %14 = vsyncpa %s13, 0
    loop: start=0, step=1, limit=4
    $region2: #{tpu_custom_call.1} parent=1 // loop_pre_header
      _
    $region3: #{tpu_custom_call.1} parent=1 // loop_header
      %s16 = sphi 0, %s20
      %p17 = scmp.ge.s32.totalorder %s16, 4
      %s23 = sphi 0, %s35
      %s24 = sphi 0, %s31
      %s25 = sphi 0, %s23
      %s26 = sphi 0, %s24
      %s27 = sphi 0, %s25
      %s28 = sphi 0, %s26
      %s40 = sphi 0, %s42
      %s43 = sphi 0, %s40
      %s44 = sphi 0, %s43
      %s60 = sphi 0, %s44
      %s64 = sphi 0, %s64
      %s66 = sphi 0, %s64
      %s67 = sphi 0, %s66
      %s81 = sphi 0, %s67
      %s85 = sphi 0, %s85
      %s87 = sphi 0, %s85
      %s88 = sphi 0, %s87
      %s102 = sphi 0, %s88
      %s110 = sphi 0, %s112
      %s113 = sphi 0, %s110
      %s114 = sphi 0, %s113
      %s130 = sphi 0, %s114
    $region4: #{tpu_custom_call.1} parent=1 // loop_header_branch
      %19 = sbr.rel (%p17) target = $region8
    $region5: #{tpu_custom_call.1} parent=1 // loop_body
      %s21 = ssub.s32 %s16, 1
      %s22 = ssub.s32 %s16, 2
      %s29 = sadd.s32 1, %s24
      %p30 = scmp.ge.s32.totalorder %s29, 1
      %s31 = scalar_select %p30, 0, %s29
      %s32 = sadd.s32 1, %s23
      %s33 = scalar_select %p30, %s32, %s23
      %p34 = scmp.ge.s32.totalorder %s33, 2
      %s35 = scalar_select %p34, 0, %s33
      %s36 = ssub.s32 %s23, %s35
      %s37 = ssub.s32 %s24, %s31
      %s38 = sor.u32 %s36, %s37
      %p39 = scmp.eq.s32.totalorder %s38, 0
      %s41 = sadd.s32 %s40, 1
      %s42 = scalar_select %p39, %s40, %s41
      %p45 = pneg %p39
      %p46 = scmp.eq.s32.totalorder %s16, 1
      %p47 = por %p45, %p46
      %p48 = scmp.ne.s32.totalorder %s40, %s43
      %p49 = scmp.eq.s32.totalorder %s16, 0
      %p50 = por %p48, %p49
      %p51 = scmp.ne.s32.totalorder %s40, %s43
      %p52 = scmp.eq.s32.totalorder %s21, 1
      %p53 = por %p51, %p52
      %p54 = scmp.ne.s32.totalorder %s43, %s44
      %p55 = scmp.eq.s32.totalorder %s21, 0
      %p56 = por %p54, %p55
      %p57 = scmp.ne.s32.totalorder %s43, %s44
      %p58 = scmp.eq.s32.totalorder %s22, 1
      %p59 = por %p57, %p58
      %p61 = scmp.ne.s32.totalorder %s44, %s60
      %p62 = scmp.eq.s32.totalorder %s22, 0
      %p63 = por %p61, %p62
      %s65 = sadd.s32 %s64, 1
      %p68 = scmp.eq.s32.totalorder %s16, 1
      %p69 = scmp.ne.s32.totalorder %s64, %s66
      %p70 = scmp.eq.s32.totalorder %s16, 0
      %p71 = por %p69, %p70
      %p72 = scmp.ne.s32.totalorder %s64, %s66
      %p73 = scmp.eq.s32.totalorder %s21, 1
      %p74 = por %p72, %p73
      %p75 = scmp.ne.s32.totalorder %s66, %s67
      %p76 = scmp.eq.s32.totalorder %s21, 0
      %p77 = por %p75, %p76
      %p78 = scmp.ne.s32.totalorder %s66, %s67
      %p79 = scmp.eq.s32.totalorder %s22, 1
      %p80 = por %p78, %p79
      %p82 = scmp.ne.s32.totalorder %s67, %s81
      %p83 = scmp.eq.s32.totalorder %s22, 0
      %p84 = por %p82, %p83
      %s86 = sadd.s32 %s85, 1
      %p89 = scmp.eq.s32.totalorder %s16, 1
      %p90 = scmp.ne.s32.totalorder %s85, %s87
      %p91 = scmp.eq.s32.totalorder %s16, 0
      %p92 = por %p90, %p91
      %p93 = scmp.ne.s32.totalorder %s85, %s87
      %p94 = scmp.eq.s32.totalorder %s21, 1
      %p95 = por %p93, %p94
      %p96 = scmp.ne.s32.totalorder %s87, %s88
      %p97 = scmp.eq.s32.totalorder %s21, 0
      %p98 = por %p96, %p97
      %p99 = scmp.ne.s32.totalorder %s87, %s88
      %p100 = scmp.eq.s32.totalorder %s22, 1
      %p101 = por %p99, %p100
      %p103 = scmp.ne.s32.totalorder %s88, %s102
      %p104 = scmp.eq.s32.totalorder %s22, 0
      %p105 = por %p103, %p104
      %s106 = ssub.s32 %s23, %s35
      %s107 = ssub.s32 %s24, %s31
      %s108 = sor.u32 %s106, %s107
      %p109 = scmp.eq.s32.totalorder %s108, 0
      %s111 = sadd.s32 %s110, 1
      %s112 = scalar_select %p109, %s110, %s111
      %p115 = pneg %p109
      %p116 = scmp.eq.s32.totalorder %s16, 1
      %p117 = por %p115, %p116
      %p118 = scmp.ne.s32.totalorder %s110, %s113
      %p119 = scmp.eq.s32.totalorder %s16, 0
      %p120 = por %p118, %p119
      %p121 = scmp.ne.s32.totalorder %s110, %s113
      %p122 = scmp.eq.s32.totalorder %s21, 1
      %p123 = por %p121, %p122
      %p124 = scmp.ne.s32.totalorder %s113, %s114
      %p125 = scmp.eq.s32.totalorder %s21, 0
      %p126 = por %p124, %p125
      %p127 = scmp.ne.s32.totalorder %s113, %s114
      %p128 = scmp.eq.s32.totalorder %s22, 1
      %p129 = por %p127, %p128
      %p131 = scmp.ne.s32.totalorder %s114, %s130
      %p132 = scmp.eq.s32.totalorder %s22, 0
      %p133 = por %p131, %p132
      %p134 = scmp.le.s32.totalorder 1, %s16
      %p135 = scmp.lt.s32.totalorder %s16, 3
      %p136 = pnand %p134, %p135
      %p137 = pneg %p136
      // Predicated region
      $region9: #{tpu_custom_call.1} parent=5 // pred_check
        _
      $region10: #{tpu_custom_call.1} parent=5 // pred_check_branch
        %139 = sbr.rel (%p136) target = $region12
      $region11: #{tpu_custom_call.1} parent=5 // pred_region
        %s140 = ssub.s32 %s16, 1
        // Predicated region
        $region13: #{tpu_custom_call.1} parent=11 // pred_check
          %p141 = pneg %p77
        $region14: #{tpu_custom_call.1} parent=11 // pred_check_branch
          %143 = sbr.rel (%p141) target = $region16
        $region15: #{tpu_custom_call.1} parent=11 // pred_region
          %145 = vsyncadd [#allocation6], 0
          %s146 = sshll.u32 %s1, 4
          %s147 = int_to_ptr.hbm [resolvable:$true] %s146
          %s148 = sshll.u32 [#allocation5], 4
          %s149 = int_to_ptr.vmem [resolvable:$true] %s148
          %154 = dma.hbm_to_vmem [thread:$0]  %s147, 2048, %s149, [#allocation6], 64, 64, 4
        $region16: #{tpu_custom_call.1} parent=11 // pred_fallthru
          _
        // Predicated region
        $region17: #{tpu_custom_call.1} parent=11 // pred_check
          %p155 = pneg %p98
        $region18: #{tpu_custom_call.1} parent=11 // pred_check_branch
          %157 = sbr.rel (%p155) target = $region20
        $region19: #{tpu_custom_call.1} parent=11 // pred_region
          _
        $region20: #{tpu_custom_call.1} parent=11 // pred_fallthru
          _
      $region12: #{tpu_custom_call.1} parent=5 // pred_fallthru
        _
      %p158 = scmp.lt.s32.totalorder %s16, 2
      // Predicated region
      $region21: #{tpu_custom_call.1} parent=5 // pred_check
        %p159 = pneg %p158
      $region22: #{tpu_custom_call.1} parent=5 // pred_check_branch
        %161 = sbr.rel (%p159) target = $region24
      $region23: #{tpu_custom_call.1} parent=5 // pred_region
        // Predicated region
        $region25: #{tpu_custom_call.1} parent=23 // pred_check
          %p162 = pneg %p50
        $region26: #{tpu_custom_call.1} parent=23 // pred_check_branch
          %164 = sbr.rel (%p162) target = $region28
        $region27: #{tpu_custom_call.1} parent=23 // pred_region
          %s165 = sand.u32 %s40, 1
          %s166 = scalar_lea.sflag [#allocation3], %s165
          %s167 = sand.u32 %s40, 1
          %s168 = smul.addr %s167, 128
          %s169 = scalar_lea.vmem [#allocation2], %s168
          %s170 = smul.u32 4, %s24
          %172 = vsyncadd %s166, 0
          %s173 = smul.addr %s23, 16
          %s174 = sadd.s32 %s170, %s173
          %s175 = smul.addr %s174, 8
          %s176 = scalar_lea.hbm %s0, %s175
          %s177 = sshll.u32 %s176, 4
          %s178 = int_to_ptr.hbm [resolvable:$true] %s177
          %s179 = sshll.u32 %s169, 4
          %s180 = int_to_ptr.vmem [resolvable:$true] %s179
          %185 = dma.hbm_to_vmem [thread:$0]  %s178, 2048, %s180, %s166, 128, 128, 8
        $region28: #{tpu_custom_call.1} parent=23 // pred_fallthru
          _
      $region24: #{tpu_custom_call.1} parent=5 // pred_fallthru
        _
      %p186 = scmp.le.s32.totalorder 1, %s16
      %p187 = scmp.lt.s32.totalorder %s16, 3
      %p188 = pnand %p186, %p187
      %p189 = pneg %p188
      // Predicated region
      $region29: #{tpu_custom_call.1} parent=5 // pred_check
        _
      $region30: #{tpu_custom_call.1} parent=5 // pred_check_branch
        %191 = sbr.rel (%p188) target = $region32
      $region31: #{tpu_custom_call.1} parent=5 // pred_region
        %s192 = ssub.s32 %s16, 1
        %s193 = sand.u32 %s43, 1
        %s194 = scalar_lea.sflag [#allocation3], %s193
        %s195 = sand.u32 %s43, 1
        %s196 = smul.addr %s195, 128
        %s197 = scalar_lea.vmem [#allocation2], %s196
        // Predicated region
        $region33: #{tpu_custom_call.1} parent=31 // pred_check
          %p198 = pneg %p56
        $region34: #{tpu_custom_call.1} parent=31 // pred_check_branch
          %200 = sbr.rel (%p198) target = $region36
        $region35: #{tpu_custom_call.1} parent=31 // pred_region
          %202 = dma.done %s194, 2048
        $region36: #{tpu_custom_call.1} parent=31 // pred_fallthru
          _
        // Predicated region
        $region37: #{tpu_custom_call.1} parent=31 // pred_check
          %p203 = pneg %p77
        $region38: #{tpu_custom_call.1} parent=31 // pred_check_branch
          %205 = sbr.rel (%p203) target = $region40
        $region39: #{tpu_custom_call.1} parent=31 // pred_region
          %207 = dma.done [#allocation6], 2048
        $region40: #{tpu_custom_call.1} parent=31 // pred_fallthru
          _
        %s208 = sand.u32 %s43, 1
        %s209 = scalar_lea.sflag [#allocation3], %s208
        %s210 = sand.u32 %s43, 1
        %s211 = smul.addr %s210, 128
        %s212 = scalar_lea.vmem [#allocation2], %s211
        %p213 = pneg %p56
        %p214 = pneg %p53
        %p215 = pneg %p77
        %p216 = pneg %p74
        %p217 = pneg %p98
        %p218 = pneg %p95
        %p219 = pneg %p126
        %p220 = pneg %p123
        %s221 = sand.u32 %s113, 1
        %s222 = scalar_lea.sflag [#allocation4], %s221
        %s223 = sand.u32 %s113, 1
        %s224 = smul.addr %s223, 8
        %s225 = scalar_lea.vmem [#allocation7], %s224
        %s226 = smul.u32 4, %s26
        %s227 = smul.u32 2, %s26
        %v228 = vld [vmem:[%s197] sm:$0xff]
        %v229 = vld [vmem:[%s197 + $0x20] sm:$0xff]
        %v230 = vld [vmem:[%s197 + $0x40] sm:$0xff]
        %v231 = vld [vmem:[%s197 + $0x60] sm:$0xff]
        %232 = vxpose.xlu0.b32.start [1/16] %v228, 128
        %233 = vxpose.xlu0.b32.cont [2/16] %v229, 128
        %234 = vxpose.xlu0.b32.cont [3/16] %v230, 128
        %235 = vxpose.xlu0.b32.cont [4/16] %v231, 128
        %236 = vxpose.xlu0.b32.cont [5/16] 0.0, 128
        %237 = vxpose.xlu0.b32.cont [6/16] 0.0, 128
        %238 = vxpose.xlu0.b32.cont [7/16] 0.0, 128
        %239 = vxpose.xlu0.b32.cont [8/16] 0.0, 128
        %240 = vxpose.xlu0.b32.cont [9/16] 0.0, 128
        %241 = vxpose.xlu0.b32.cont [10/16] 0.0, 128
        %242 = vxpose.xlu0.b32.cont [11/16] 0.0, 128
        %243 = vxpose.xlu0.b32.cont [12/16] 0.0, 128
        %244 = vxpose.xlu0.b32.cont [13/16] 0.0, 128
        %245 = vxpose.xlu0.b32.cont [14/16] 0.0, 128
        %246 = vxpose.xlu0.b32.cont [15/16] 0.0, 128
        %247 = vxpose.xlu0.b32.end [16/16] 0.0, 128
        %v248 = vpop.trf.xlu0
        %v249 = vpop.trf.xlu0
        %v250 = vpop.trf.xlu0
        %v251 = vpop.trf.xlu0
        %v252 = vpop.trf.xlu0
        %v253 = vpop.trf.xlu0
        %v254 = vpop.trf.xlu0
        %v255 = vpop.trf.xlu0
        %v256 = vpop.trf.xlu0
        %v257 = vpop.trf.xlu0
        %v258 = vpop.trf.xlu0
        %v259 = vpop.trf.xlu0
        %v260 = vpop.trf.xlu0
        %v261 = vpop.trf.xlu0
        %v262 = vpop.trf.xlu0
        %v263 = vpop.trf.xlu0
        %v268 = vrot.slane %v249, 7
        %vm269 = vcmask 1041409
        %v270 = vsel %vm269, %v268, %v248
        %v271 = vrot.slane %v250, 6
        %vm272 = vcmask 1042434
        %v273 = vsel %vm272, %v271, %v270
        %v274 = vrot.slane %v251, 5
        %vm275 = vcmask 1043459
        %v276 = vsel %vm275, %v274, %v273
        %v278 = vrot.slane %v248, 1
        %v279 = vsel %vm269, %v249, %v278
        %v280 = vrot.slane %v250, 7
        %v281 = vsel %vm272, %v280, %v279
        %v282 = vrot.slane %v251, 6
        %v283 = vsel %vm275, %v282, %v281
        %284 = vrot.lane.b32.xlu0 %v283, 32
        %v285 = vpop.permute.xlu0 %284
        %v287 = vrot.slane %v248, 2
        %v288 = vrot.slane %v249, 1
        %v289 = vsel %vm269, %v288, %v287
        %v290 = vsel %vm272, %v250, %v289
        %v291 = vrot.slane %v251, 7
        %v292 = vsel %vm275, %v291, %v290
        %293 = vrot.lane.b32.xlu0 %v292, 64
        %v294 = vpop.permute.xlu0 %293
        %v296 = vrot.slane %v248, 3
        %v297 = vrot.slane %v249, 2
        %v298 = vsel %vm269, %v297, %v296
        %v299 = vrot.slane %v250, 1
        %v300 = vsel %vm272, %v299, %v298
        %v301 = vsel %vm275, %v251, %v300
        %302 = vrot.lane.b32.xlu0 %v301, 96
        %v303 = vpop.permute.xlu0 %302
        %v305 = vrot.slane %v248, 4
        %v306 = vrot.slane %v249, 3
        %v307 = vsel %vm269, %v306, %v305
        %v308 = vrot.slane %v250, 2
        %v309 = vsel %vm272, %v308, %v307
        %v310 = vrot.slane %v251, 1
        %v311 = vsel %vm275, %v310, %v309
        %v313 = vrot.slane %v248, 5
        %v314 = vrot.slane %v249, 4
        %v315 = vsel %vm269, %v314, %v313
        %v316 = vrot.slane %v250, 3
        %v317 = vsel %vm272, %v316, %v315
        %v318 = vrot.slane %v251, 2
        %v319 = vsel %vm275, %v318, %v317
        %320 = vrot.lane.b32.xlu0 %v319, 32
        %v321 = vpop.permute.xlu0 %320
        %v323 = vrot.slane %v248, 6
        %v324 = vrot.slane %v249, 5
        %v325 = vsel %vm269, %v324, %v323
        %v326 = vrot.slane %v250, 4
        %v327 = vsel %vm272, %v326, %v325
        %v328 = vrot.slane %v251, 3
        %v329 = vsel %vm275, %v328, %v327
        %330 = vrot.lane.b32.xlu0 %v329, 64
        %v331 = vpop.permute.xlu0 %330
        %v333 = vrot.slane %v248, 7
        %v334 = vrot.slane %v249, 6
        %v335 = vsel %vm269, %v334, %v333
        %v336 = vrot.slane %v250, 5
        %v337 = vsel %vm272, %v336, %v335
        %v338 = vrot.slane %v251, 4
        %v339 = vsel %vm275, %v338, %v337
        %340 = vrot.lane.b32.xlu0 %v339, 96
        %v341 = vpop.permute.xlu0 %340
        %vm343 = vcmask 261120
        %v344 = vsel %vm343, %v276, %v285
        %vm345 = vcmask 523264
        %v346 = vsel %vm345, %v344, %v294
        %vm347 = vcmask 785408
        %v348 = vsel %vm347, %v346, %v303
        %v349 = vsel %vm343, %v311, %v321
        %v350 = vsel %vm345, %v349, %v331
        %v351 = vsel %vm347, %v350, %v341
        %v352 = vld [vmem:[%s197 + $0x8] sm:$0xff]
        %v353 = vld [vmem:[%s197 + $0x28] sm:$0xff]
        %v354 = vld [vmem:[%s197 + $0x48] sm:$0xff]
        %v355 = vld [vmem:[%s197 + $0x68] sm:$0xff]
        %356 = vxpose.xlu0.b32.start [1/16] %v352, 128
        %357 = vxpose.xlu0.b32.cont [2/16] %v353, 128
        %358 = vxpose.xlu0.b32.cont [3/16] %v354, 128
        %359 = vxpose.xlu0.b32.cont [4/16] %v355, 128
        %360 = vxpose.xlu0.b32.cont [5/16] 0.0, 128
        %361 = vxpose.xlu0.b32.cont [6/16] 0.0, 128
        %362 = vxpose.xlu0.b32.cont [7/16] 0.0, 128
        %363 = vxpose.xlu0.b32.cont [8/16] 0.0, 128
        %364 = vxpose.xlu0.b32.cont [9/16] 0.0, 128
        %365 = vxpose.xlu0.b32.cont [10/16] 0.0, 128
        %366 = vxpose.xlu0.b32.cont [11/16] 0.0, 128
        %367 = vxpose.xlu0.b32.cont [12/16] 0.0, 128
        %368 = vxpose.xlu0.b32.cont [13/16] 0.0, 128
        %369 = vxpose.xlu0.b32.cont [14/16] 0.0, 128
        %370 = vxpose.xlu0.b32.cont [15/16] 0.0, 128
        %371 = vxpose.xlu0.b32.end [16/16] 0.0, 128
        %v372 = vpop.trf.xlu0
        %v373 = vpop.trf.xlu0
        %v374 = vpop.trf.xlu0
        %v375 = vpop.trf.xlu0
        %v376 = vpop.trf.xlu0
        %v377 = vpop.trf.xlu0
        %v378 = vpop.trf.xlu0
        %v379 = vpop.trf.xlu0
        %v380 = vpop.trf.xlu0
        %v381 = vpop.trf.xlu0
        %v382 = vpop.trf.xlu0
        %v383 = vpop.trf.xlu0
        %v384 = vpop.trf.xlu0
        %v385 = vpop.trf.xlu0
        %v386 = vpop.trf.xlu0
        %v387 = vpop.trf.xlu0
        %v392 = vrot.slane %v373, 7
        %v393 = vsel %vm269, %v392, %v372
        %v394 = vrot.slane %v374, 6
        %v395 = vsel %vm272, %v394, %v393
        %v396 = vrot.slane %v375, 5
        %v397 = vsel %vm275, %v396, %v395
        %v399 = vrot.slane %v372, 1
        %v400 = vsel %vm269, %v373, %v399
        %v401 = vrot.slane %v374, 7
        %v402 = vsel %vm272, %v401, %v400
        %v403 = vrot.slane %v375, 6
        %v404 = vsel %vm275, %v403, %v402
        %405 = vrot.lane.b32.xlu0 %v404, 32
        %v406 = vpop.permute.xlu0 %405
        %v408 = vrot.slane %v372, 2
        %v409 = vrot.slane %v373, 1
        %v410 = vsel %vm269, %v409, %v408
        %v411 = vsel %vm272, %v374, %v410
        %v412 = vrot.slane %v375, 7
        %v413 = vsel %vm275, %v412, %v411
        %414 = vrot.lane.b32.xlu0 %v413, 64
        %v415 = vpop.permute.xlu0 %414
        %v417 = vrot.slane %v372, 3
        %v418 = vrot.slane %v373, 2
        %v419 = vsel %vm269, %v418, %v417
        %v420 = vrot.slane %v374, 1
        %v421 = vsel %vm272, %v420, %v419
        %v422 = vsel %vm275, %v375, %v421
        %423 = vrot.lane.b32.xlu0 %v422, 96
        %v424 = vpop.permute.xlu0 %423
        %v426 = vrot.slane %v372, 4
        %v427 = vrot.slane %v373, 3
        %v428 = vsel %vm269, %v427, %v426
        %v429 = vrot.slane %v374, 2
        %v430 = vsel %vm272, %v429, %v428
        %v431 = vrot.slane %v375, 1
        %v432 = vsel %vm275, %v431, %v430
        %v434 = vrot.slane %v372, 5
        %v435 = vrot.slane %v373, 4
        %v436 = vsel %vm269, %v435, %v434
        %v437 = vrot.slane %v374, 3
        %v438 = vsel %vm272, %v437, %v436
        %v439 = vrot.slane %v375, 2
        %v440 = vsel %vm275, %v439, %v438
        %441 = vrot.lane.b32.xlu0 %v440, 32
        %v442 = vpop.permute.xlu0 %441
        %v444 = vrot.slane %v372, 6
        %v445 = vrot.slane %v373, 5
        %v446 = vsel %vm269, %v445, %v444
        %v447 = vrot.slane %v374, 4
        %v448 = vsel %vm272, %v447, %v446
        %v449 = vrot.slane %v375, 3
        %v450 = vsel %vm275, %v449, %v448
        %451 = vrot.lane.b32.xlu0 %v450, 64
        %v452 = vpop.permute.xlu0 %451
        %v454 = vrot.slane %v372, 7
        %v455 = vrot.slane %v373, 6
        %v456 = vsel %vm269, %v455, %v454
        %v457 = vrot.slane %v374, 5
        %v458 = vsel %vm272, %v457, %v456
        %v459 = vrot.slane %v375, 4
        %v460 = vsel %vm275, %v459, %v458
        %461 = vrot.lane.b32.xlu0 %v460, 96
        %v462 = vpop.permute.xlu0 %461
        %v464 = vsel %vm343, %v397, %v406
        %v465 = vsel %vm345, %v464, %v415
        %v466 = vsel %vm347, %v465, %v424
        %v467 = vsel %vm343, %v432, %v442
        %v468 = vsel %vm345, %v467, %v452
        %v469 = vsel %vm347, %v468, %v462
        %v470 = vld [vmem:[%s197 + $0x10] sm:$0xff]
        %v471 = vld [vmem:[%s197 + $0x30] sm:$0xff]
        %v472 = vld [vmem:[%s197 + $0x50] sm:$0xff]
        %v473 = vld [vmem:[%s197 + $0x70] sm:$0xff]
        %474 = vxpose.xlu0.b32.start [1/16] %v470, 128
        %475 = vxpose.xlu0.b32.cont [2/16] %v471, 128
        %476 = vxpose.xlu0.b32.cont [3/16] %v472, 128
        %477 = vxpose.xlu0.b32.cont [4/16] %v473, 128
        %478 = vxpose.xlu0.b32.cont [5/16] 0.0, 128
        %479 = vxpose.xlu0.b32.cont [6/16] 0.0, 128
        %480 = vxpose.xlu0.b32.cont [7/16] 0.0, 128
        %481 = vxpose.xlu0.b32.cont [8/16] 0.0, 128
        %482 = vxpose.xlu0.b32.cont [9/16] 0.0, 128
        %483 = vxpose.xlu0.b32.cont [10/16] 0.0, 128
        %484 = vxpose.xlu0.b32.cont [11/16] 0.0, 128
        %485 = vxpose.xlu0.b32.cont [12/16] 0.0, 128
        %486 = vxpose.xlu0.b32.cont [13/16] 0.0, 128
        %487 = vxpose.xlu0.b32.cont [14/16] 0.0, 128
        %488 = vxpose.xlu0.b32.cont [15/16] 0.0, 128
        %489 = vxpose.xlu0.b32.end [16/16] 0.0, 128
        %v490 = vpop.trf.xlu0
        %v491 = vpop.trf.xlu0
        %v492 = vpop.trf.xlu0
        %v493 = vpop.trf.xlu0
        %v494 = vpop.trf.xlu0
        %v495 = vpop.trf.xlu0
        %v496 = vpop.trf.xlu0
        %v497 = vpop.trf.xlu0
        %v498 = vpop.trf.xlu0
        %v499 = vpop.trf.xlu0
        %v500 = vpop.trf.xlu0
        %v501 = vpop.trf.xlu0
        %v502 = vpop.trf.xlu0
        %v503 = vpop.trf.xlu0
        %v504 = vpop.trf.xlu0
        %v505 = vpop.trf.xlu0
        %v510 = vrot.slane %v491, 7
        %v511 = vsel %vm269, %v510, %v490
        %v512 = vrot.slane %v492, 6
        %v513 = vsel %vm272, %v512, %v511
        %v514 = vrot.slane %v493, 5
        %v515 = vsel %vm275, %v514, %v513
        %v517 = vrot.slane %v490, 1
        %v518 = vsel %vm269, %v491, %v517
        %v519 = vrot.slane %v492, 7
        %v520 = vsel %vm272, %v519, %v518
        %v521 = vrot.slane %v493, 6
        %v522 = vsel %vm275, %v521, %v520
        %523 = vrot.lane.b32.xlu0 %v522, 32
        %v524 = vpop.permute.xlu0 %523
        %v526 = vrot.slane %v490, 2
        %v527 = vrot.slane %v491, 1
        %v528 = vsel %vm269, %v527, %v526
        %v529 = vsel %vm272, %v492, %v528
        %v530 = vrot.slane %v493, 7
        %v531 = vsel %vm275, %v530, %v529
        %532 = vrot.lane.b32.xlu0 %v531, 64
        %v533 = vpop.permute.xlu0 %532
        %v535 = vrot.slane %v490, 3
        %v536 = vrot.slane %v491, 2
        %v537 = vsel %vm269, %v536, %v535
        %v538 = vrot.slane %v492, 1
        %v539 = vsel %vm272, %v538, %v537
        %v540 = vsel %vm275, %v493, %v539
        %541 = vrot.lane.b32.xlu0 %v540, 96
        %v542 = vpop.permute.xlu0 %541
        %v544 = vrot.slane %v490, 4
        %v545 = vrot.slane %v491, 3
        %v546 = vsel %vm269, %v545, %v544
        %v547 = vrot.slane %v492, 2
        %v548 = vsel %vm272, %v547, %v546
        %v549 = vrot.slane %v493, 1
        %v550 = vsel %vm275, %v549, %v548
        %v552 = vrot.slane %v490, 5
        %v553 = vrot.slane %v491, 4
        %v554 = vsel %vm269, %v553, %v552
        %v555 = vrot.slane %v492, 3
        %v556 = vsel %vm272, %v555, %v554
        %v557 = vrot.slane %v493, 2
        %v558 = vsel %vm275, %v557, %v556
        %559 = vrot.lane.b32.xlu0 %v558, 32
        %v560 = vpop.permute.xlu0 %559
        %v562 = vrot.slane %v490, 6
        %v563 = vrot.slane %v491, 5
        %v564 = vsel %vm269, %v563, %v562
        %v565 = vrot.slane %v492, 4
        %v566 = vsel %vm272, %v565, %v564
        %v567 = vrot.slane %v493, 3
        %v568 = vsel %vm275, %v567, %v566
        %569 = vrot.lane.b32.xlu0 %v568, 64
        %v570 = vpop.permute.xlu0 %569
        %v572 = vrot.slane %v490, 7
        %v573 = vrot.slane %v491, 6
        %v574 = vsel %vm269, %v573, %v572
        %v575 = vrot.slane %v492, 5
        %v576 = vsel %vm272, %v575, %v574
        %v577 = vrot.slane %v493, 4
        %v578 = vsel %vm275, %v577, %v576
        %579 = vrot.lane.b32.xlu0 %v578, 96
        %v580 = vpop.permute.xlu0 %579
        %v582 = vsel %vm343, %v515, %v524
        %v583 = vsel %vm345, %v582, %v533
        %v584 = vsel %vm347, %v583, %v542
        %v585 = vsel %vm343, %v550, %v560
        %v586 = vsel %vm345, %v585, %v570
        %v587 = vsel %vm347, %v586, %v580
        %v588 = vld [vmem:[%s197 + $0x18] sm:$0xff]
        %v589 = vld [vmem:[%s197 + $0x38] sm:$0xff]
        %v590 = vld [vmem:[%s197 + $0x58] sm:$0xff]
        %v591 = vld [vmem:[%s197 + $0x78] sm:$0xff]
        %592 = vxpose.xlu0.b32.start [1/16] %v588, 128
        %593 = vxpose.xlu0.b32.cont [2/16] %v589, 128
        %594 = vxpose.xlu0.b32.cont [3/16] %v590, 128
        %595 = vxpose.xlu0.b32.cont [4/16] %v591, 128
        %596 = vxpose.xlu0.b32.cont [5/16] 0.0, 128
        %597 = vxpose.xlu0.b32.cont [6/16] 0.0, 128
        %598 = vxpose.xlu0.b32.cont [7/16] 0.0, 128
        %599 = vxpose.xlu0.b32.cont [8/16] 0.0, 128
        %600 = vxpose.xlu0.b32.cont [9/16] 0.0, 128
        %601 = vxpose.xlu0.b32.cont [10/16] 0.0, 128
        %602 = vxpose.xlu0.b32.cont [11/16] 0.0, 128
        %603 = vxpose.xlu0.b32.cont [12/16] 0.0, 128
        %604 = vxpose.xlu0.b32.cont [13/16] 0.0, 128
        %605 = vxpose.xlu0.b32.cont [14/16] 0.0, 128
        %606 = vxpose.xlu0.b32.cont [15/16] 0.0, 128
        %607 = vxpose.xlu0.b32.end [16/16] 0.0, 128
        %v608 = vpop.trf.xlu0
        %v609 = vpop.trf.xlu0
        %v610 = vpop.trf.xlu0
        %v611 = vpop.trf.xlu0
        %v612 = vpop.trf.xlu0
        %v613 = vpop.trf.xlu0
        %v614 = vpop.trf.xlu0
        %v615 = vpop.trf.xlu0
        %v616 = vpop.trf.xlu0
        %v617 = vpop.trf.xlu0
        %v618 = vpop.trf.xlu0
        %v619 = vpop.trf.xlu0
        %v620 = vpop.trf.xlu0
        %v621 = vpop.trf.xlu0
        %v622 = vpop.trf.xlu0
        %v623 = vpop.trf.xlu0
        %v628 = vrot.slane %v609, 7
        %v629 = vsel %vm269, %v628, %v608
        %v630 = vrot.slane %v610, 6
        %v631 = vsel %vm272, %v630, %v629
        %v632 = vrot.slane %v611, 5
        %v633 = vsel %vm275, %v632, %v631
        %v635 = vrot.slane %v608, 1
        %v636 = vsel %vm269, %v609, %v635
        %v637 = vrot.slane %v610, 7
        %v638 = vsel %vm272, %v637, %v636
        %v639 = vrot.slane %v611, 6
        %v640 = vsel %vm275, %v639, %v638
        %641 = vrot.lane.b32.xlu0 %v640, 32
        %v642 = vpop.permute.xlu0 %641
        %v644 = vrot.slane %v608, 2
        %v645 = vrot.slane %v609, 1
        %v646 = vsel %vm269, %v645, %v644
        %v647 = vsel %vm272, %v610, %v646
        %v648 = vrot.slane %v611, 7
        %v649 = vsel %vm275, %v648, %v647
        %650 = vrot.lane.b32.xlu0 %v649, 64
        %v651 = vpop.permute.xlu0 %650
        %v653 = vrot.slane %v608, 3
        %v654 = vrot.slane %v609, 2
        %v655 = vsel %vm269, %v654, %v653
        %v656 = vrot.slane %v610, 1
        %v657 = vsel %vm272, %v656, %v655
        %v658 = vsel %vm275, %v611, %v657
        %659 = vrot.lane.b32.xlu0 %v658, 96
        %v660 = vpop.permute.xlu0 %659
        %v662 = vrot.slane %v608, 4
        %v663 = vrot.slane %v609, 3
        %v664 = vsel %vm269, %v663, %v662
        %v665 = vrot.slane %v610, 2
        %v666 = vsel %vm272, %v665, %v664
        %v667 = vrot.slane %v611, 1
        %v668 = vsel %vm275, %v667, %v666
        %v670 = vrot.slane %v608, 5
        %v671 = vrot.slane %v609, 4
        %v672 = vsel %vm269, %v671, %v670
        %v673 = vrot.slane %v610, 3
        %v674 = vsel %vm272, %v673, %v672
        %v675 = vrot.slane %v611, 2
        %v676 = vsel %vm275, %v675, %v674
        %677 = vrot.lane.b32.xlu0 %v676, 32
        %v678 = vpop.permute.xlu0 %677
        %v680 = vrot.slane %v608, 6
        %v681 = vrot.slane %v609, 5
        %v682 = vsel %vm269, %v681, %v680
        %v683 = vrot.slane %v610, 4
        %v684 = vsel %vm272, %v683, %v682
        %v685 = vrot.slane %v611, 3
        %v686 = vsel %vm275, %v685, %v684
        %687 = vrot.lane.b32.xlu0 %v686, 64
        %v688 = vpop.permute.xlu0 %687
        %v690 = vrot.slane %v608, 7
        %v691 = vrot.slane %v609, 6
        %v692 = vsel %vm269, %v691, %v690
        %v693 = vrot.slane %v610, 5
        %v694 = vsel %vm272, %v693, %v692
        %v695 = vrot.slane %v611, 4
        %v696 = vsel %vm275, %v695, %v694
        %697 = vrot.lane.b32.xlu0 %v696, 96
        %v698 = vpop.permute.xlu0 %697
        %v700 = vsel %vm343, %v633, %v642
        %v701 = vsel %vm345, %v700, %v651
        %v702 = vsel %vm347, %v701, %v660
        %v703 = vsel %vm343, %v668, %v678
        %v704 = vsel %vm345, %v703, %v688
        %v705 = vsel %vm347, %v704, %v698
        %v708 = vrot.slane %v466, 4
        %v709 = vrot.slane %v469, 4
        %v714 = vrot.slane %v702, 4
        %v715 = vrot.slane %v705, 4
        %vm718 = vcmask 1043456
        %v719 = vsel %vm718, %v348, %v708
        %v720 = vsel %vm718, %v351, %v709
        %v721 = vsel %vm718, %v584, %v714
        %v722 = vsel %vm718, %v587, %v715
        %v723 = vpack.c.bf16 %v721, %v719
        %v724 = vpack.c.bf16 %v722, %v720
        %v725 = vld [vmem:[#allocation5] sm:$0xf]
        %v726 = vld [vmem:[#allocation5 + $0x4] sm:$0xf]
        %v727 = vld [vmem:[#allocation5 + $0x8] sm:$0xf]
        %v728 = vld [vmem:[#allocation5 + $0xc] sm:$0xf]
        %v729 = vld [vmem:[#allocation5 + $0x10] sm:$0xf]
        %v730 = vld [vmem:[#allocation5 + $0x14] sm:$0xf]
        %v731 = vld [vmem:[#allocation5 + $0x18] sm:$0xf]
        %v732 = vld [vmem:[#allocation5 + $0x1c] sm:$0xf]
        %v733 = vld [vmem:[#allocation5 + $0x20] sm:$0xf]
        %v734 = vld [vmem:[#allocation5 + $0x24] sm:$0xf]
        %v735 = vld [vmem:[#allocation5 + $0x28] sm:$0xf]
        %v736 = vld [vmem:[#allocation5 + $0x2c] sm:$0xf]
        %v737 = vld [vmem:[#allocation5 + $0x30] sm:$0xf]
        %v738 = vld [vmem:[#allocation5 + $0x34] sm:$0xf]
        %v739 = vld [vmem:[#allocation5 + $0x38] sm:$0xf]
        %v740 = vld [vmem:[#allocation5 + $0x3c] sm:$0xf]
        %v741 = vld [vmem:[#allocation5 + $0x40] sm:$0xf]
        %v742 = vld [vmem:[#allocation5 + $0x44] sm:$0xf]
        %v743 = vld [vmem:[#allocation5 + $0x48] sm:$0xf]
        %v744 = vld [vmem:[#allocation5 + $0x4c] sm:$0xf]
        %v745 = vld [vmem:[#allocation5 + $0x50] sm:$0xf]
        %v746 = vld [vmem:[#allocation5 + $0x54] sm:$0xf]
        %v747 = vld [vmem:[#allocation5 + $0x58] sm:$0xf]
        %v748 = vld [vmem:[#allocation5 + $0x5c] sm:$0xf]
        %v749 = vld [vmem:[#allocation5 + $0x60] sm:$0xf]
        %v750 = vld [vmem:[#allocation5 + $0x64] sm:$0xf]
        %v751 = vld [vmem:[#allocation5 + $0x68] sm:$0xf]
        %v752 = vld [vmem:[#allocation5 + $0x6c] sm:$0xf]
        %v753 = vld [vmem:[#allocation5 + $0x70] sm:$0xf]
        %v754 = vld [vmem:[#allocation5 + $0x74] sm:$0xf]
        %v755 = vld [vmem:[#allocation5 + $0x78] sm:$0xf]
        %v756 = vld [vmem:[#allocation5 + $0x7c] sm:$0xf]
        %v757 = vld [vmem:[%s2] sm:$0x1]
        %v759 = vperm.slane %v757, 0
        %v793 = vunpack.c.l.b16 %v725
        %v794 = vunpack.c.l.b16 %v726
        %v795 = vunpack.c.l.b16 %v727
        %v796 = vunpack.c.l.b16 %v728
        %v797 = vunpack.c.l.b16 %v729
        %v798 = vunpack.c.l.b16 %v730
        %v799 = vunpack.c.l.b16 %v731
        %v800 = vunpack.c.l.b16 %v732
        %v801 = vunpack.c.l.b16 %v733
        %v802 = vunpack.c.l.b16 %v734
        %v803 = vunpack.c.l.b16 %v735
        %v804 = vunpack.c.l.b16 %v736
        %v805 = vunpack.c.l.b16 %v737
        %v806 = vunpack.c.l.b16 %v738
        %v807 = vunpack.c.l.b16 %v739
        %v808 = vunpack.c.l.b16 %v740
        %v809 = vunpack.c.l.b16 %v741
        %v810 = vunpack.c.l.b16 %v742
        %v811 = vunpack.c.l.b16 %v743
        %v812 = vunpack.c.l.b16 %v744
        %v813 = vunpack.c.l.b16 %v745
        %v814 = vunpack.c.l.b16 %v746
        %v815 = vunpack.c.l.b16 %v747
        %v816 = vunpack.c.l.b16 %v748
        %v817 = vunpack.c.l.b16 %v749
        %v818 = vunpack.c.l.b16 %v750
        %v819 = vunpack.c.l.b16 %v751
        %v820 = vunpack.c.l.b16 %v752
        %v821 = vunpack.c.l.b16 %v753
        %v822 = vunpack.c.l.b16 %v754
        %v823 = vunpack.c.l.b16 %v755
        %v824 = vunpack.c.l.b16 %v756
        %v825 = vpack.c.b16 %v794, %v793
        %v826 = vpack.c.b16 %v796, %v795
        %v827 = vpack.c.b16 %v798, %v797
        %v828 = vpack.c.b16 %v800, %v799
        %v829 = vpack.c.b16 %v802, %v801
        %v830 = vpack.c.b16 %v804, %v803
        %v831 = vpack.c.b16 %v806, %v805
        %v832 = vpack.c.b16 %v808, %v807
        %v833 = vpack.c.b16 %v810, %v809
        %v834 = vpack.c.b16 %v812, %v811
        %v835 = vpack.c.b16 %v814, %v813
        %v836 = vpack.c.b16 %v816, %v815
        %v837 = vpack.c.b16 %v818, %v817
        %v838 = vpack.c.b16 %v820, %v819
        %v839 = vpack.c.b16 %v822, %v821
        %v840 = vpack.c.b16 %v824, %v823
        %857 = vmatpush.bf16.msra.mxu0 %v832
        %858 = vmatpush.bf16.msra.mxu0 %v831
        %859 = vmatpush.bf16.msra.mxu0 %v830
        %860 = vmatpush.bf16.msra.mxu0 %v829
        %861 = vmatpush.bf16.msra.mxu0 %v828
        %862 = vmatpush.bf16.msra.mxu0 %v827
        %863 = vmatpush.bf16.msra.mxu0 %v826
        %864 = vmatpush.bf16.msra.mxu0 %v825
        %865 = vmatmul.bf16.gmra.mxu0 %v723
        %v866 = vpop.f32.mrf.mxu0
        %v867 = vadd.f32 %v759, %v866
        %v868 = vpop.f32.mrf.mxu0
        %v869 = vadd.f32 %v759, %v868
        %870 = vdwg.mxu0
        %871 = vmatpush.bf16.msra.mxu0 %v840
        %872 = vmatpush.bf16.msra.mxu0 %v839
        %873 = vmatpush.bf16.msra.mxu0 %v838
        %874 = vmatpush.bf16.msra.mxu0 %v837
        %875 = vmatpush.bf16.msra.mxu0 %v836
        %876 = vmatpush.bf16.msra.mxu0 %v835
        %877 = vmatpush.bf16.msra.mxu0 %v834
        %878 = vmatpush.bf16.msra.mxu0 %v833
        %879 = vmatmul.bf16.gmra.mxu0 %v724
        %v880 = vpop.f32.mrf.mxu0
        %v881 = vadd.f32 %v867, %v880
        %v882 = vpop.f32.mrf.mxu0
        %v883 = vadd.f32 %v869, %v882
        %884 = vdwg.mxu0
        %v885 = vpack.c.bf16 %v881, %v881
        %v886 = vpack.c.bf16 %v883, %v883
        %887 = vst [vmem:[%s225] sm:$0xf] %v885
        %888 = vst [vmem:[%s225 + $0x4] sm:$0xf] %v886
        %s889 = sand.u32 %s113, 1
        %s890 = scalar_lea.sflag [#allocation4], %s889
        %s891 = sand.u32 %s113, 1
        %s892 = smul.addr %s891, 8
        %s893 = scalar_lea.vmem [#allocation7], %s892
        // Predicated region
        $region41: #{tpu_custom_call.1} parent=31 // pred_check
          %p894 = pneg %p123
        $region42: #{tpu_custom_call.1} parent=31 // pred_check_branch
          %896 = sbr.rel (%p894) target = $region44
        $region43: #{tpu_custom_call.1} parent=31 // pred_region
          %s897 = smul.u32 2, %s26
          %899 = vsyncadd %s890, 0
          %s900 = smul.addr %s25, 2
          %s901 = sadd.s32 %s897, %s900
          %s902 = smul.addr %s901, 4
          %s903 = scalar_lea.hbm %s3, %s902
          %s904 = sshll.u32 %s893, 4
          %s905 = int_to_ptr.vmem [resolvable:$true] %s904
          %s906 = sshll.u32 %s903, 4
          %s907 = int_to_ptr.hbm [resolvable:$true] %s906
          %912 = dma.vmem_to_hbm [thread:$0]  %s905, 128, %s907, %s890, 64, 64, 4
        $region44: #{tpu_custom_call.1} parent=31 // pred_fallthru
          _
      $region32: #{tpu_custom_call.1} parent=5 // pred_fallthru
        _
      %p913 = scmp.le.s32.totalorder 2, %s16
      // Predicated region
      $region45: #{tpu_custom_call.1} parent=5 // pred_check
        %p914 = pneg %p913
      $region46: #{tpu_custom_call.1} parent=5 // pred_check_branch
        %916 = sbr.rel (%p914) target = $region48
      $region47: #{tpu_custom_call.1} parent=5 // pred_region
        %s917 = ssub.s32 %s16, 2
        // Predicated region
        $region49: #{tpu_custom_call.1} parent=47 // pred_check
          %p918 = pneg %p129
        $region50: #{tpu_custom_call.1} parent=47 // pred_check_branch
          %920 = sbr.rel (%p918) target = $region52
        $region51: #{tpu_custom_call.1} parent=47 // pred_region
          %s921 = sand.u32 %s114, 1
          %s922 = scalar_lea.sflag [#allocation4], %s921
          %s923 = sand.u32 %s114, 1
          %s924 = smul.addr %s923, 8
          %s925 = scalar_lea.vmem [#allocation7], %s924
          %927 = dma.done %s922, 128
        $region52: #{tpu_custom_call.1} parent=47 // pred_fallthru
          _
      $region48: #{tpu_custom_call.1} parent=5 // pred_fallthru
        _
    $region6: #{tpu_custom_call.1} parent=1 // loop_footer
      %s20 = sadd.s32 1, %s16
    $region7: #{tpu_custom_call.1} parent=1 // loop_footer_branch
      %15 = sbr.rel target = $region3
    $region8: #{tpu_custom_call.1} parent=1 // loop_exit
      _
    %928 = vsyncpa [#allocation3], 1
    %s929 = scalar_lea.sflag [#allocation3], 1
    %930 = vsyncpa %s929, 1
    %931 = vsyncpa [#allocation6], 1
    %932 = vsyncpa [#allocation4], 1
    %s933 = scalar_lea.sflag [#allocation4], 1
    %934 = vsyncpa %s933, 1

// kernel: tpu_custom_call.1
$region0: #{tpu_custom_call.1}
  #allocation0 [shape = 'u32[]', space=smem, size = 0x4, offset = 0x4, fixed_abs, tag = 'smem constant byte address 0x4 - core index']
  #allocation1 [shape = 'u32[72,128]{1,0:T(1,128)}', space=vmem, size = 0x9000, scoped, tag = 'internal scratch']
  %s0 = inlined_call_operand.hbm [shape: bf16[32,256], index: 0, kind: input, shape index: {}]
  %s1 = inlined_call_operand.hbm [shape: bf16[256,128], index: 1, kind: input, shape index: {}]
  %s2 = inlined_call_operand.vmem [shape: f32[1,128], index: 2, kind: input, shape index: {}]
  %s3 = inlined_call_operand.hbm [shape: bf16[32,128], index: 3, kind: output, shape index: {}]
  %s4 = sld [smem:[#allocation0]]
  $region30: #{tpu_custom_call.1} parent=0
    _
  %s6 = ssub.s32 1, %s4
  %s7 = scalar_select 0, %s6, %s4
  $region1: #{tpu_custom_call.1} parent=0
    #allocation2 [shape = 'u8[16384]{0}', space=vmem, size = 0x4000, scoped, tag = 'input window, operand 0, single buffered']
    #allocation3 [shape = 's32[1]{0}', space=sflag, size = 0x4, scoped, tag = 'scoped memory for tpu_custom_call.1']
    #allocation4 [shape = 's32[1]{0}', space=sflag, size = 0x4, scoped, tag = 'scoped memory for tpu_custom_call.1']
    #allocation5 [shape = 'u8[65536]{0}', space=vmem, size = 0x10000, scoped, tag = 'input window, operand 1, single buffered']
    #allocation6 [shape = 's32[1]{0}', space=sflag, size = 0x4, scoped, tag = 'scoped memory for tpu_custom_call.1']
    #allocation7 [shape = 'u8[8192]{0}', space=vmem, size = 0x2000, scoped, tag = 'output window, operand 0, single buffered']
    %8 = vsyncpa [#allocation3], 0
    %9 = vsyncpa [#allocation6], 0
    %10 = vsyncpa [#allocation4], 0
    // Predicated region
    $region2: #{tpu_custom_call.1} parent=1 // pred_check
      _
    $region3: #{tpu_custom_call.1} parent=1 // pred_check_branch
      %12 = sbr.rel (0) target = $region5
    $region4: #{tpu_custom_call.1} parent=1 // pred_region
      %14 = vsyncadd [#allocation3], 0
      %s15 = sshll.u32 %s0, 4
      %s16 = int_to_ptr.hbm [resolvable:$true] %s15
      %s17 = sshll.u32 [#allocation2], 4
      %s18 = int_to_ptr.vmem [resolvable:$true] %s17
      %23 = dma.hbm_to_vmem [thread:$0]  %s16, 512, %s18, [#allocation3], 128, 128, 8
    $region5: #{tpu_custom_call.1} parent=1 // pred_fallthru
      _
    // Predicated region
    $region6: #{tpu_custom_call.1} parent=1 // pred_check
      _
    $region7: #{tpu_custom_call.1} parent=1 // pred_check_branch
      %25 = sbr.rel (0) target = $region9
    $region8: #{tpu_custom_call.1} parent=1 // pred_region
      %27 = vsyncadd [#allocation6], 0
      %s28 = sshll.u32 %s1, 4
      %s29 = int_to_ptr.hbm [resolvable:$true] %s28
      %s30 = sshll.u32 [#allocation5], 4
      %s31 = int_to_ptr.vmem [resolvable:$true] %s30
      %36 = dma.hbm_to_vmem [thread:$0]  %s29, 2048, %s31, [#allocation6], 64, 64, 4
    $region9: #{tpu_custom_call.1} parent=1 // pred_fallthru
      _
    // Predicated region
    $region10: #{tpu_custom_call.1} parent=1 // pred_check
      _
    $region11: #{tpu_custom_call.1} parent=1 // pred_check_branch
      %38 = sbr.rel (0) target = $region13
    $region12: #{tpu_custom_call.1} parent=1 // pred_region
      _
    $region13: #{tpu_custom_call.1} parent=1 // pred_fallthru
      _
    // Predicated region
    $region14: #{tpu_custom_call.1} parent=1 // pred_check
      _
    $region15: #{tpu_custom_call.1} parent=1 // pred_check_branch
      %40 = sbr.rel (0) target = $region17
    $region16: #{tpu_custom_call.1} parent=1 // pred_region
      %42 = dma.done [#allocation3], 512
    $region17: #{tpu_custom_call.1} parent=1 // pred_fallthru
      _
    // Predicated region
    $region18: #{tpu_custom_call.1} parent=1 // pred_check
      _
    $region19: #{tpu_custom_call.1} parent=1 // pred_check_branch
      %44 = sbr.rel (0) target = $region21
    $region20: #{tpu_custom_call.1} parent=1 // pred_region
      %46 = dma.done [#allocation6], 2048
    $region21: #{tpu_custom_call.1} parent=1 // pred_fallthru
      _
    %v47 = vld [vmem:[#allocation2] sm:$0xff]
    %v48 = vld [vmem:[#allocation2 + $0x8] sm:$0xff]
    %v49 = vld [vmem:[#allocation2 + $0x10] sm:$0xff]
    %v50 = vld [vmem:[#allocation2 + $0x18] sm:$0xff]
    %v51 = vld [vmem:[#allocation5] sm:$0xf]
    %v52 = vld [vmem:[#allocation5 + $0x4] sm:$0xf]
    %v53 = vld [vmem:[#allocation5 + $0x8] sm:$0xf]
    %v54 = vld [vmem:[#allocation5 + $0xc] sm:$0xf]
    %v55 = vld [vmem:[#allocation5 + $0x10] sm:$0xf]
    %v56 = vld [vmem:[#allocation5 + $0x14] sm:$0xf]
    %v57 = vld [vmem:[#allocation5 + $0x18] sm:$0xf]
    %v58 = vld [vmem:[#allocation5 + $0x1c] sm:$0xf]
    %v59 = vld [vmem:[#allocation5 + $0x20] sm:$0xf]
    %v60 = vld [vmem:[#allocation5 + $0x24] sm:$0xf]
    %v61 = vld [vmem:[#allocation5 + $0x28] sm:$0xf]
    %v62 = vld [vmem:[#allocation5 + $0x2c] sm:$0xf]
    %v63 = vld [vmem:[#allocation5 + $0x30] sm:$0xf]
    %v64 = vld [vmem:[#allocation5 + $0x34] sm:$0xf]
    %v65 = vld [vmem:[#allocation5 + $0x38] sm:$0xf]
    %v66 = vld [vmem:[#allocation5 + $0x3c] sm:$0xf]
    %v67 = vld [vmem:[#allocation5 + $0x40] sm:$0xf]
    %v68 = vld [vmem:[#allocation5 + $0x44] sm:$0xf]
    %v69 = vld [vmem:[#allocation5 + $0x48] sm:$0xf]
    %v70 = vld [vmem:[#allocation5 + $0x4c] sm:$0xf]
    %v71 = vld [vmem:[#allocation5 + $0x50] sm:$0xf]
    %v72 = vld [vmem:[#allocation5 + $0x54] sm:$0xf]
    %v73 = vld [vmem:[#allocation5 + $0x58] sm:$0xf]
    %v74 = vld [vmem:[#allocation5 + $0x5c] sm:$0xf]
    %v75 = vld [vmem:[#allocation5 + $0x60] sm:$0xf]
    %v76 = vld [vmem:[#allocation5 + $0x64] sm:$0xf]
    %v77 = vld [vmem:[#allocation5 + $0x68] sm:$0xf]
    %v78 = vld [vmem:[#allocation5 + $0x6c] sm:$0xf]
    %v79 = vld [vmem:[#allocation5 + $0x70] sm:$0xf]
    %v80 = vld [vmem:[#allocation5 + $0x74] sm:$0xf]
    %v81 = vld [vmem:[#allocation5 + $0x78] sm:$0xf]
    %v82 = vld [vmem:[#allocation5 + $0x7c] sm:$0xf]
    %v83 = vld [vmem:[%s2] sm:$0x1]
    %v85 = vperm.slane %v83, 0
    %v91 = vunpack.c.l.b16 %v47
    %v92 = vunpack.c.h.b16 %v47
    %v93 = vunpack.c.l.b16 %v48
    %v94 = vunpack.c.h.b16 %v48
    %v95 = vunpack.c.l.b16 %v49
    %v96 = vunpack.c.h.b16 %v49
    %v97 = vunpack.c.l.b16 %v50
    %v98 = vunpack.c.h.b16 %v50
    %v99 = vpack.c.b16 %v93, %v91
    %v100 = vpack.c.b16 %v94, %v92
    %v101 = vpack.c.b16 %v97, %v95
    %v102 = vpack.c.b16 %v98, %v96
    %v139 = vunpack.c.l.b16 %v51
    %v140 = vunpack.c.l.b16 %v52
    %v141 = vunpack.c.l.b16 %v53
    %v142 = vunpack.c.l.b16 %v54
    %v143 = vunpack.c.l.b16 %v55
    %v144 = vunpack.c.l.b16 %v56
    %v145 = vunpack.c.l.b16 %v57
    %v146 = vunpack.c.l.b16 %v58
    %v147 = vunpack.c.l.b16 %v59
    %v148 = vunpack.c.l.b16 %v60
    %v149 = vunpack.c.l.b16 %v61
    %v150 = vunpack.c.l.b16 %v62
    %v151 = vunpack.c.l.b16 %v63
    %v152 = vunpack.c.l.b16 %v64
    %v153 = vunpack.c.l.b16 %v65
    %v154 = vunpack.c.l.b16 %v66
    %v155 = vunpack.c.l.b16 %v67
    %v156 = vunpack.c.l.b16 %v68
    %v157 = vunpack.c.l.b16 %v69
    %v158 = vunpack.c.l.b16 %v70
    %v159 = vunpack.c.l.b16 %v71
    %v160 = vunpack.c.l.b16 %v72
    %v161 = vunpack.c.l.b16 %v73
    %v162 = vunpack.c.l.b16 %v74
    %v163 = vunpack.c.l.b16 %v75
    %v164 = vunpack.c.l.b16 %v76
    %v165 = vunpack.c.l.b16 %v77
    %v166 = vunpack.c.l.b16 %v78
    %v167 = vunpack.c.l.b16 %v79
    %v168 = vunpack.c.l.b16 %v80
    %v169 = vunpack.c.l.b16 %v81
    %v170 = vunpack.c.l.b16 %v82
    %v171 = vpack.c.b16 %v140, %v139
    %v172 = vpack.c.b16 %v142, %v141
    %v173 = vpack.c.b16 %v144, %v143
    %v174 = vpack.c.b16 %v146, %v145
    %v175 = vpack.c.b16 %v148, %v147
    %v176 = vpack.c.b16 %v150, %v149
    %v177 = vpack.c.b16 %v152, %v151
    %v178 = vpack.c.b16 %v154, %v153
    %v179 = vpack.c.b16 %v156, %v155
    %v180 = vpack.c.b16 %v158, %v157
    %v181 = vpack.c.b16 %v160, %v159
    %v182 = vpack.c.b16 %v162, %v161
    %v183 = vpack.c.b16 %v164, %v163
    %v184 = vpack.c.b16 %v166, %v165
    %v185 = vpack.c.b16 %v168, %v167
    %v186 = vpack.c.b16 %v170, %v169
    %203 = vmatpush.bf16.msra.mxu0 %v178
    %204 = vmatpush.bf16.msra.mxu0 %v177
    %205 = vmatpush.bf16.msra.mxu0 %v176
    %206 = vmatpush.bf16.msra.mxu0 %v175
    %207 = vmatpush.bf16.msra.mxu0 %v174
    %208 = vmatpush.bf16.msra.mxu0 %v173
    %209 = vmatpush.bf16.msra.mxu0 %v172
    %210 = vmatpush.bf16.msra.mxu0 %v171
    %211 = vmatmul.bf16.gmra.mxu0 %v99
    %v212 = vpop.f32.mrf.mxu0
    %v213 = vadd.f32 %v85, %v212
    %v214 = vpop.f32.mrf.mxu0
    %v215 = vadd.f32 %v85, %v214
    %216 = vmatmul.bf16.gmra.mxu0 %v101
    %v217 = vpop.f32.mrf.mxu0
    %v218 = vadd.f32 %v85, %v217
    %v219 = vpop.f32.mrf.mxu0
    %v220 = vadd.f32 %v85, %v219
    %221 = vdwg.mxu0
    %222 = vmatpush.bf16.msra.mxu0 %v186
    %223 = vmatpush.bf16.msra.mxu0 %v185
    %224 = vmatpush.bf16.msra.mxu0 %v184
    %225 = vmatpush.bf16.msra.mxu0 %v183
    %226 = vmatpush.bf16.msra.mxu0 %v182
    %227 = vmatpush.bf16.msra.mxu0 %v181
    %228 = vmatpush.bf16.msra.mxu0 %v180
    %229 = vmatpush.bf16.msra.mxu0 %v179
    %230 = vmatmul.bf16.gmra.mxu0 %v100
    %v231 = vpop.f32.mrf.mxu0
    %v232 = vadd.f32 %v213, %v231
    %v233 = vpop.f32.mrf.mxu0
    %v234 = vadd.f32 %v215, %v233
    %235 = vmatmul.bf16.gmra.mxu0 %v102
    %v236 = vpop.f32.mrf.mxu0
    %v237 = vadd.f32 %v218, %v236
    %v238 = vpop.f32.mrf.mxu0
    %v239 = vadd.f32 %v220, %v238
    %240 = vdwg.mxu0
    %v241 = vpack.c.bf16 %v232, %v232
    %v242 = vpack.c.bf16 %v234, %v234
    %v243 = vpack.c.bf16 %v237, %v237
    %v244 = vpack.c.bf16 %v239, %v239
    %245 = vst [vmem:[#allocation7] sm:$0xf] %v241
    %246 = vst [vmem:[#allocation7 + $0x4] sm:$0xf] %v242
    %247 = vst [vmem:[#allocation7 + $0x8] sm:$0xf] %v243
    %248 = vst [vmem:[#allocation7 + $0xc] sm:$0xf] %v244
    // Predicated region
    $region22: #{tpu_custom_call.1} parent=1 // pred_check
      _
    $region23: #{tpu_custom_call.1} parent=1 // pred_check_branch
      %250 = sbr.rel (0) target = $region25
    $region24: #{tpu_custom_call.1} parent=1 // pred_region
      %252 = vsyncadd [#allocation4], 0
      %s253 = sshll.u32 [#allocation7], 4
      %s254 = int_to_ptr.vmem [resolvable:$true] %s253
      %s255 = sshll.u32 %s3, 4
      %s256 = int_to_ptr.hbm [resolvable:$true] %s255
      %261 = dma.vmem_to_hbm [thread:$0]  %s254, 256, %s256, [#allocation4], 64, 64, 4
    $region25: #{tpu_custom_call.1} parent=1 // pred_fallthru
      _
    // Predicated region
    $region26: #{tpu_custom_call.1} parent=1 // pred_check
      _
    $region27: #{tpu_custom_call.1} parent=1 // pred_check_branch
      %263 = sbr.rel (0) target = $region29
    $region28: #{tpu_custom_call.1} parent=1 // pred_region
      %265 = dma.done [#allocation4], 256
    $region29: #{tpu_custom_call.1} parent=1 // pred_fallthru
      _
    %266 = vsyncpa [#allocation3], 1
    %267 = vsyncpa [#allocation6], 1
    %268 = vsyncpa [#allocation4], 1

</llo_original>
